<compile_context>
chip_gen: v7x
topology: tpu7x:2x2x1
jax: 0.10.0
libtpu: 0.0.40
codegen_flags: <defaults>
</compile_context>

<pallas_src>
import numpy as np
import jax
import jax.numpy as jnp
from jax import lax
from jax.experimental import pallas as pl
from jax.experimental.pallas import tpu as pltpu

# ----------------------------- configuration -------------------------------
F1 = 8           # temporal filters
D = 2            # spatial filters per temporal filter
F2 = 16          # pointwise filters
FROI = 16        # ROI count (module default 246; kept small for the test)
NCLASS = 7
EPS = 1e-3       # BatchNorm eps
N = 2            # batch
T = 30           # time steps
KS = (4, 6, 10)      # temporal kernel lengths of the three branches
PADS = (0, 1, 3)     # time padding of the three branches

FB = F1 * D          # channels per branch after spatial conv   (16)
CC = FB * 3          # concatenated channels                    (48)
W1 = T - KS[0] + 1   # width after branch conv1+conv2           (27)
W2 = W1 // 3         # width after branch avg-pool              (9)
WL2 = W2 - 3         # width after layer2 grouped conv (k=4)    (6)
W3 = WL2 // 3        # width after layer2 avg-pool              (2)

PADMAX = max(PADS)                         # universal time padding        (3)
TPAD = T + 2 * PADMAX                      # padded time width             (36)
OFFS = tuple(PADMAX - p for p in PADS)     # per-branch base offsets   (3,2,0)
NSHIFT = max(o + k for o, k in zip(OFFS, KS))   # distinct time shifts     (10)
XTAIL = NSHIFT - 1   # extra zero lanes at the end of the packed x tile     (9)
NPG_MAX = 16         # max samples packed into the lane axis per grid step
LANES = 128          # class axis padded to one full vreg of lanes

# packed-parameter slab row offsets
WP_M = CC                 # 48 : layer2 stacked weights start
WP_L = CC + 4 * F2        # 112: final linear weights start
WP_ROWS = WP_L + F2       # 128
WPK_COLS = max(NSHIFT * FROI, W3 * LANES, CC)   # 256
BP_C2 = CC                # 48 : layer2 bias start
BP_BL = CC + F2           # 64 : final linear bias row
BP_ROWS = BP_BL + 1       # 65


# ------------------------------- kernel ------------------------------------
def _elu(v):
    # exp only evaluated on the clamped (negative) side.
    return jnp.where(v > 0.0, v, jnp.exp(jnp.minimum(v, 0.0)) - 1.0)


def make_kernel(npg, npg_sub):
    L = npg * TPAD          # packed (TPAD-strided) lane width

    def kernel(x_ref, rk_ref, p2_ref, wpk_ref, bpk_ref, out_ref, cols_ref):
        x = x_ref[0]                                           # (FROI, L+XTAIL)

        # ---- layer1: im2col via static lane shifts into VMEM scratch -------
        # x carries XTAIL trailing zero lanes so every shifted slice is a
        # full-width (FROI, L) tile (finite everywhere -> no NaN poisoning of
        # the unused columns downstream).  Then a single K=160 MXU matmul
        # applies all three branch conv1+BN1+conv2+BN2 pipelines at once.
        for s in range(NSHIFT):
            cols_ref[s * FROI:(s + 1) * FROI, :] = x[:, s:s + L]
        wcat = wpk_ref[0:CC, 0:NSHIFT * FROI]                  # (48, 160)
        cb = bpk_ref[0:CC, 0:1]                                # (48, 1)
        e1 = _elu(jnp.dot(wcat, cols_ref[...],
                          preferred_element_type=jnp.float32) + cb)   # (48, L)

        # ---- layer2: grouped (1,4) conv + 1x1 conv + BN folded into mall;
        # the branch avg-pool and the tap shift are folded into rk (whose rows
        # for per-sample invalid columns of e1 are zero).
        mall = wpk_ref[WP_M:WP_M + 4 * F2, 0:CC]               # (64, 48)
        v = jnp.dot(mall, e1, preferred_element_type=jnp.float32)     # (64, L)
        acc2 = jnp.dot(v[0:F2, :], rk_ref[0],
                       preferred_element_type=jnp.float32)
        for k in range(1, 4):
            acc2 = acc2 + jnp.dot(v[k * F2:(k + 1) * F2, :], rk_ref[k],
                                  preferred_element_type=jnp.float32)
        e2 = _elu(acc2 + bpk_ref[BP_C2:BP_C2 + F2, 0:1])       # (16, npg*WL2)

        # ---- layer3: avg-pool + flatten + linear + softmax ------------------
        # p2 columns are w-major with sublane stride npg_sub (multiple of 8)
        # so every slice below is an aligned full-tile access.
        h = jnp.dot(e2, p2_ref[...],
                    preferred_element_type=jnp.float32)        # (16, W3*npg_sub)
        wl = wpk_ref[WP_L:WP_L + F2, 0:W3 * LANES]             # (16, W3*128)
        b = jnp.dot(h.T, wl, preferred_element_type=jnp.float32)  # (W3*npg_sub, W3*128)
        logits = bpk_ref[BP_BL:BP_BL + 1, :]                   # (1, 128) bias
        for w in range(W3):
            logits = logits + b[w * npg_sub:(w + 1) * npg_sub,
                                w * LANES:(w + 1) * LANES]
        # classes >= NCLASS carry a -1e30 bias -> softmax gives exactly 0 there.
        mx = jnp.max(logits, axis=-1, keepdims=True)
        e = jnp.exp(logits - mx)
        inv = pl.reciprocal(jnp.sum(e, axis=-1, keepdims=True), approx=False)
        out_ref[0] = e * inv                                   # (npg_sub, 128)

    return kernel


# ------------------- host-side folding / constant packing -------------------
def build_kernel_constants(P, npg, npg_sub):
    """Fold eval-mode BatchNorms into the convs and pack everything the kernel
    needs into a few dense slabs (numpy, host-side layout plumbing only)."""
    grp = np.arange(FB) // D

    # --- layer1: combined spatial x temporal weights + bias, all branches ---
    wcat = np.zeros((CC, NSHIFT * FROI), np.float32)
    cb = np.zeros((CC,), np.float32)
    for bi in range(3):
        b, K, off = bi + 1, KS[bi], OFFS[bi]
        s1 = np.asarray(P[f"bn1g{b}"]) / np.sqrt(np.asarray(P[f"bn1v{b}"]) + EPS)
        t1 = np.asarray(P[f"bn1b{b}"]) - np.asarray(P[f"bn1m{b}"]) * s1
        w1e = np.asarray(P[f"c1w{b}"])[:, 0, 0, :] * s1[:, None]        # (F1, K)
        b1e = np.asarray(P[f"c1b{b}"]) * s1 + t1                        # (F1,)
        s2 = np.asarray(P[f"bn2g{b}"]) / np.sqrt(np.asarray(P[f"bn2v{b}"]) + EPS)
        t2 = np.asarray(P[f"bn2b{b}"]) - np.asarray(P[f"bn2m{b}"]) * s2
        w2s = np.asarray(P[f"c2w{b}"])[:, 0, :, 0]                      # (FB, FROI)
        wk = w1e[grp] * s2[:, None]                                     # (FB, K)
        for k in range(K):
            s = off + k
            wcat[bi * FB:(bi + 1) * FB, s * FROI:(s + 1) * FROI] = \
                wk[:, k:k + 1] * w2s
        cb[bi * FB:(bi + 1) * FB] = ((b1e[grp] * w2s.sum(axis=1)
                                      + np.asarray(P[f"c2b{b}"])) * s2 + t2)

    # --- layer2: grouped conv densified, 1x1 conv + BN folded ----------------
    s3 = np.asarray(P["bn3g"]) / np.sqrt(np.asarray(P["bn3v"]) + EPS)
    t3 = np.asarray(P["bn3b"]) - np.asarray(P["bn3m"]) * s3
    dww = np.asarray(P["dww"])                                          # (CC,3,1,4)
    dense = np.zeros((CC, CC, 4), np.float32)
    for o in range(CC):
        g0 = (o // 3) * 3
        dense[o, g0:g0 + 3, :] = dww[o, :, 0, :]
    pw = np.asarray(P["pww"])[:, :, 0, 0] * s3[:, None]                 # (F2, CC)
    mall = np.zeros((4 * F2, CC), np.float32)
    for k in range(4):
        mall[k * F2:(k + 1) * F2, :] = pw @ dense[:, :, k]

    # --- layer3: linear rearranged for the kernel's flatten order ------------
    linw = np.asarray(P["linw"])                                        # (NCLASS, F2*W3)
    wlcat = np.zeros((F2, W3 * LANES), np.float32)
    for w in range(W3):
        for c in range(F2):
            wlcat[c, w * LANES:w * LANES + NCLASS] = linw[:, c * W3 + w]
    blpad = np.full((LANES,), -1e30, np.float32)      # padded classes -> prob 0
    blpad[:NCLASS] = np.asarray(P["linb"])

    # --- packed parameter slabs ----------------------------------------------
    wpack = np.zeros((WP_ROWS, WPK_COLS), np.float32)
    wpack[0:CC, 0:NSHIFT * FROI] = wcat
    wpack[WP_M:WP_M + 4 * F2, 0:CC] = mall
    wpack[WP_L:WP_L + F2, 0:W3 * LANES] = wlcat
    bpack = np.zeros((BP_ROWS, LANES), np.float32)
    bpack[0:CC, 0] = cb
    bpack[BP_C2:BP_C2 + F2, 0] = t3
    bpack[BP_BL, :] = blpad

    # --- structural pool / tap matrices, TPAD-strided column layout ----------
    L, L2 = npg * TPAD, npg * WL2
    rk = np.zeros((4, L, L2), np.float32)           # branch avg-pool(3) + tap k
    p2 = np.zeros((L2, W3 * npg_sub), np.float32)   # layer2 avg-pool(3), w-major
    for smp in range(npg):
        for k in range(4):
            for t in range(WL2):
                r0 = smp * TPAD + 3 * (t + k)
                rk[k, r0:r0 + 3, smp * WL2 + t] = 1.0 / 3.0
        for w in range(W3):
            p2[smp * WL2 + 3 * w:smp * WL2 + 3 * w + 3,
               w * npg_sub + smp] = 1.0 / 3.0

    return dict(rk=jnp.asarray(rk), p2=jnp.asarray(p2),
                wpack=jnp.asarray(wpack), bpack=jnp.asarray(bpack))


# ------------------------------ wrapper -------------------------------------
def _num_tensorcores():
    """Best-effort TensorCore-per-device count (v7x has 2; v5e/v6e have 1)."""
    try:
        kind = jax.devices()[0].device_kind.lower()
    except Exception:
        return 1
    return 2 if "v7" in kind else 1


def fmrinet_forward(x, P):
    """x: (batch, FROI, T) float32 -> (batch, NCLASS) softmax probabilities."""
    nb = x.shape[0]
    ncore = _num_tensorcores()
    # generation-aware batching: one step on single-core chips, an even number
    # of steps on dual-core chips so neither TensorCore gets a straggler step.
    g = max(1, -(-nb // NPG_MAX))
    if ncore > 1:
        g = -(-max(g, ncore) // ncore) * ncore
    npg = -(-nb // g)                       # samples packed per grid step
    npg_sub = -(-npg // 8) * 8              # sublane-padded sample count (>=8)
    kc = build_kernel_constants(P, npg, npg_sub)

    L, L2 = npg * TPAD, npg * WL2
    LX = L + XTAIL
    npad = g * npg

    # single universally padded input, batch packed along the lane axis:
    # (nb, FROI, T) -> (g, FROI, npg*TPAD + XTAIL)
    xp = jnp.pad(x, ((0, npad - nb), (0, 0), (PADMAX, PADMAX)))
    xp = xp.reshape(g, npg, FROI, TPAD).transpose(0, 2, 1, 3)
    xp = xp.reshape(g, FROI, L)
    xp = jnp.pad(xp, ((0, 0), (0, 0), (0, XTAIL)))

    flops = 2 * g * (CC * NSHIFT * FROI * L          # layer1 fused conv
                     + 4 * F2 * CC * L               # layer2 channel mix
                     + 4 * F2 * L * L2               # layer2 pool + taps
                     + F2 * L2 * W3 * npg_sub        # layer3 pool
                     + W3 * npg_sub * F2 * W3 * LANES)   # final linear
    transc = g * (CC * L + F2 * L2 + npg_sub * (LANES + 1))
    nbytes = 4 * int(xp.size + kc["rk"].size + kc["p2"].size
                     + kc["wpack"].size + kc["bpack"].size
                     + g * npg_sub * LANES)

    out = pl.pallas_call(
        make_kernel(npg, npg_sub),
        out_shape=jax.ShapeDtypeStruct((g, npg_sub, LANES), jnp.float32),
        grid_spec=pltpu.PrefetchScalarGridSpec(
            num_scalar_prefetch=0,
            grid=(g,),
            in_specs=[
                pl.BlockSpec((1, FROI, LX), lambda i: (i, 0, 0)),
                pl.BlockSpec((4, L, L2), lambda i: (0, 0, 0)),
                pl.BlockSpec((L2, W3 * npg_sub), lambda i: (0, 0)),
                pl.BlockSpec((WP_ROWS, WPK_COLS), lambda i: (0, 0)),
                pl.BlockSpec((BP_ROWS, LANES), lambda i: (0, 0)),
            ],
            out_specs=pl.BlockSpec((1, npg_sub, LANES), lambda i: (i, 0, 0)),
            scratch_shapes=[pltpu.VMEM((NSHIFT * FROI, L), jnp.float32)],
        ),
        compiler_params=pltpu.CompilerParams(
            dimension_semantics=(("parallel",) if g > 1 else ("arbitrary",))),
        cost_estimate=pl.CostEstimate(flops=int(flops),
                                      transcendentals=int(transc),
                                      bytes_accessed=int(nbytes)),
    )(xp, kc["rk"], kc["p2"], kc["wpack"], kc["bpack"])

    return out[:, :npg, :NCLASS].reshape(g * npg, NCLASS)[:nb]


# --------------------- deterministic parameter setup ------------------------
def init_params(key):
    keys = iter(jax.random.split(key, 48))

    def nrm(shape, scale=0.25):
        return scale * jax.random.normal(next(keys), shape, jnp.float32)

    def unif(shape, lo, hi):
        return jax.random.uniform(next(keys), shape, jnp.float32, lo, hi)

    P = {}
    for b, K in zip((1, 2, 3), KS):
        P[f"c1w{b}"] = nrm((F1, 1, 1, K))
        P[f"c1b{b}"] = nrm((F1,))
        P[f"bn1g{b}"] = unif((F1,), 0.8, 1.2)
        P[f"bn1b{b}"] = nrm((F1,))
        P[f"bn1m{b}"] = nrm((F1,))
        P[f"bn1v{b}"] = unif((F1,), 0.5, 1.5)
        P[f"c2w{b}"] = nrm((FB, 1, FROI, 1))
        P[f"c2b{b}"] = nrm((FB,))
        P[f"bn2g{b}"] = unif((FB,), 0.8, 1.2)
        P[f"bn2b{b}"] = nrm((FB,))
        P[f"bn2m{b}"] = nrm((FB,))
        P[f"bn2v{b}"] = unif((FB,), 0.5, 1.5)
    P["dww"] = nrm((CC, 3, 1, 4))          # grouped conv, groups = FB
    P["pww"] = nrm((F2, CC, 1, 1))         # 1x1 pointwise conv
    P["bn3g"] = unif((F2,), 0.8, 1.2)
    P["bn3b"] = nrm((F2,))
    P["bn3m"] = nrm((F2,))
    P["bn3v"] = unif((F2,), 0.5, 1.5)
    P["linw"] = nrm((NCLASS, F2 * W3))     # LazyLinear materialized shape
    P["linb"] = nrm((NCLASS,))
    return P


# ------------------------- plain-JAX reference ------------------------------
def reference_forward(x_nchw, P):
    def conv(x, w, b=None, groups=1, pad=(0, 0)):
        y = lax.conv_general_dilated(
            x, w, window_strides=(1, 1),
            padding=((pad[0], pad[0]), (pad[1], pad[1])),
            dimension_numbers=("NCHW", "OIHW", "NCHW"),
            feature_group_count=groups)
        if b is not None:
            y = y + b[None, :, None, None]
        return y

    def bn(x, g, be, m, v):
        s = g / jnp.sqrt(v + EPS)
        return x * s[None, :, None, None] + (be - m * s)[None, :, None, None]

    def elu(x):
        return jnp.where(x > 0, x, jnp.exp(x) - 1.0)

    def pool3(x):
        n_, c, hh, w = x.shape
        wo = w // 3
        return jnp.mean(x[..., :wo * 3].reshape(n_, c, hh, wo, 3), axis=-1)

    outs = []
    for b, pd in zip((1, 2, 3), PADS):
        y = conv(x_nchw, P[f"c1w{b}"], P[f"c1b{b}"], pad=(0, pd))
        y = bn(y, P[f"bn1g{b}"], P[f"bn1b{b}"], P[f"bn1m{b}"], P[f"bn1v{b}"])
        y = conv(y, P[f"c2w{b}"], P[f"c2b{b}"], groups=F1)
        y = bn(y, P[f"bn2g{b}"], P[f"bn2b{b}"], P[f"bn2m{b}"], P[f"bn2v{b}"])
        y = pool3(elu(y))
        outs.append(y)
    y = jnp.concatenate(outs, axis=1)                 # (N, CC, 1, W2)
    y = conv(y, P["dww"], groups=FB)
    y = conv(y, P["pww"])
    y = bn(y, P["bn3g"], P["bn3b"], P["bn3m"], P["bn3v"])
    y = pool3(elu(y))                                 # (N, F2, 1, W3)
    flat = y.reshape(y.shape[0], -1)
    logits = flat @ P["linw"].T + P["linb"]
    return jax.nn.softmax(logits, axis=1)


# --------------------------------- main --------------------------------------
if __name__ == "__main__":
    key = jax.random.PRNGKey(0)
    kx, kpar = jax.random.split(key)
    x = jax.random.normal(kx, (N, FROI, T), jnp.float32)   # (batch, ROI, time)
    P = init_params(kpar)

    out = jax.block_until_ready(fmrinet_forward(x, P))
    assert out.shape == (N, NCLASS)

    ref = reference_forward(x[:, None, :, :], P)           # NCHW reference
    np.testing.assert_allclose(np.asarray(out), np.asarray(ref),
                               rtol=1e-4, atol=1e-5)
    print("KERNEL_OK")
</pallas_src>

<mosaic_0001>
module attributes {stable_mosaic.version = 11 : i64} {
  func.func @kernel(%arg0: i32, %arg1: memref<1x16x81xf32, #tpu.memory_space<vmem>>, %arg2: memref<4x72x12xf32, #tpu.memory_space<vmem>>, %arg3: memref<12x16xf32, #tpu.memory_space<vmem>>, %arg4: memref<128x256xf32, #tpu.memory_space<vmem>>, %arg5: memref<65x128xf32, #tpu.memory_space<vmem>>, %arg6: memref<1x8x128xf32, #tpu.memory_space<vmem>>, %arg7: memref<160x72xf32, #tpu.memory_space<vmem>>) attributes {dimension_semantics = [#tpu.dimension_semantics<arbitrary>], iteration_bounds = array<i64: 1>, scalar_prefetch = 0 : i64, scratch_operands = 1 : i64, tpu.core_type = #tpu.core_type<tc>, window_params = [{transform_indices = @transform_0, window_bounds = array<i64: 1, 16, 81>}, {pipeline_mode = #tpu.pipeline_mode<synchronous>, transform_indices = @transform_1, window_bounds = array<i64: 4, 72, 12>}, {pipeline_mode = #tpu.pipeline_mode<synchronous>, transform_indices = @transform_2, window_bounds = array<i64: 12, 16>}, {pipeline_mode = #tpu.pipeline_mode<synchronous>, transform_indices = @transform_3, window_bounds = array<i64: 128, 256>}, {pipeline_mode = #tpu.pipeline_mode<synchronous>, transform_indices = @transform_4, window_bounds = array<i64: 65, 128>}, {transform_indices = @transform_5, window_bounds = array<i64: 1, 8, 128>}]} {
    %c0 = arith.constant 0 : index
    %c0_0 = arith.constant 0 : index
    %c0_1 = arith.constant 0 : index
    %0 = vector.load %arg1[%c0, %c0_0, %c0_1] : memref<1x16x81xf32, #tpu.memory_space<vmem>>, vector<1x16x81xf32>
    %1 = vector.shape_cast %0 : vector<1x16x81xf32> to vector<16x81xf32>
    %2 = vector.extract_strided_slice %1 {offsets = [0, 0], sizes = [16, 72], strides = [1, 1]} : vector<16x81xf32> to vector<16x72xf32>
    %c0_2 = arith.constant 0 : index
    %c0_3 = arith.constant 0 : index
    %3 = vector.load %arg7[%c0_2, %c0_3] : memref<160x72xf32, #tpu.memory_space<vmem>>, vector<16x72xf32>
    tpu.vector_store %arg7[%c0_2, %c0_3], %2 {strides = array<i32>} : memref<160x72xf32, #tpu.memory_space<vmem>>, vector<16x72xf32>,
    %4 = vector.extract_strided_slice %1 {offsets = [0, 1], sizes = [16, 72], strides = [1, 1]} : vector<16x81xf32> to vector<16x72xf32>
    %c16 = arith.constant 16 : index
    %c0_4 = arith.constant 0 : index
    %5 = vector.load %arg7[%c16, %c0_4] : memref<160x72xf32, #tpu.memory_space<vmem>>, vector<16x72xf32>
    tpu.vector_store %arg7[%c16, %c0_4], %4 {strides = array<i32>} : memref<160x72xf32, #tpu.memory_space<vmem>>, vector<16x72xf32>,
    %6 = vector.extract_strided_slice %1 {offsets = [0, 2], sizes = [16, 72], strides = [1, 1]} : vector<16x81xf32> to vector<16x72xf32>
    %c32 = arith.constant 32 : index
    %c0_5 = arith.constant 0 : index
    %7 = vector.load %arg7[%c32, %c0_5] : memref<160x72xf32, #tpu.memory_space<vmem>>, vector<16x72xf32>
    tpu.vector_store %arg7[%c32, %c0_5], %6 {strides = array<i32>} : memref<160x72xf32, #tpu.memory_space<vmem>>, vector<16x72xf32>,
    %8 = vector.extract_strided_slice %1 {offsets = [0, 3], sizes = [16, 72], strides = [1, 1]} : vector<16x81xf32> to vector<16x72xf32>
    %c48 = arith.constant 48 : index
    %c0_6 = arith.constant 0 : index
    %9 = vector.load %arg7[%c48, %c0_6] : memref<160x72xf32, #tpu.memory_space<vmem>>, vector<16x72xf32>
    tpu.vector_store %arg7[%c48, %c0_6], %8 {strides = array<i32>} : memref<160x72xf32, #tpu.memory_space<vmem>>, vector<16x72xf32>,
    %10 = vector.extract_strided_slice %1 {offsets = [0, 4], sizes = [16, 72], strides = [1, 1]} : vector<16x81xf32> to vector<16x72xf32>
    %c64 = arith.constant 64 : index
    %c0_7 = arith.constant 0 : index
    %11 = vector.load %arg7[%c64, %c0_7] : memref<160x72xf32, #tpu.memory_space<vmem>>, vector<16x72xf32>
    tpu.vector_store %arg7[%c64, %c0_7], %10 {strides = array<i32>} : memref<160x72xf32, #tpu.memory_space<vmem>>, vector<16x72xf32>,
    %12 = vector.extract_strided_slice %1 {offsets = [0, 5], sizes = [16, 72], strides = [1, 1]} : vector<16x81xf32> to vector<16x72xf32>
    %c80 = arith.constant 80 : index
    %c0_8 = arith.constant 0 : index
    %13 = vector.load %arg7[%c80, %c0_8] : memref<160x72xf32, #tpu.memory_space<vmem>>, vector<16x72xf32>
    tpu.vector_store %arg7[%c80, %c0_8], %12 {strides = array<i32>} : memref<160x72xf32, #tpu.memory_space<vmem>>, vector<16x72xf32>,
    %14 = vector.extract_strided_slice %1 {offsets = [0, 6], sizes = [16, 72], strides = [1, 1]} : vector<16x81xf32> to vector<16x72xf32>
    %c96 = arith.constant 96 : index
    %c0_9 = arith.constant 0 : index
    %15 = vector.load %arg7[%c96, %c0_9] : memref<160x72xf32, #tpu.memory_space<vmem>>, vector<16x72xf32>
    tpu.vector_store %arg7[%c96, %c0_9], %14 {strides = array<i32>} : memref<160x72xf32, #tpu.memory_space<vmem>>, vector<16x72xf32>,
    %16 = vector.extract_strided_slice %1 {offsets = [0, 7], sizes = [16, 72], strides = [1, 1]} : vector<16x81xf32> to vector<16x72xf32>
    %c112 = arith.constant 112 : index
    %c0_10 = arith.constant 0 : index
    %17 = vector.load %arg7[%c112, %c0_10] : memref<160x72xf32, #tpu.memory_space<vmem>>, vector<16x72xf32>
    tpu.vector_store %arg7[%c112, %c0_10], %16 {strides = array<i32>} : memref<160x72xf32, #tpu.memory_space<vmem>>, vector<16x72xf32>,
    %18 = vector.extract_strided_slice %1 {offsets = [0, 8], sizes = [16, 72], strides = [1, 1]} : vector<16x81xf32> to vector<16x72xf32>
    %c128 = arith.constant 128 : index
    %c0_11 = arith.constant 0 : index
    %19 = vector.load %arg7[%c128, %c0_11] : memref<160x72xf32, #tpu.memory_space<vmem>>, vector<16x72xf32>
    tpu.vector_store %arg7[%c128, %c0_11], %18 {strides = array<i32>} : memref<160x72xf32, #tpu.memory_space<vmem>>, vector<16x72xf32>,
    %20 = vector.extract_strided_slice %1 {offsets = [0, 9], sizes = [16, 72], strides = [1, 1]} : vector<16x81xf32> to vector<16x72xf32>
    %c144 = arith.constant 144 : index
    %c0_12 = arith.constant 0 : index
    %21 = vector.load %arg7[%c144, %c0_12] : memref<160x72xf32, #tpu.memory_space<vmem>>, vector<16x72xf32>
    tpu.vector_store %arg7[%c144, %c0_12], %20 {strides = array<i32>} : memref<160x72xf32, #tpu.memory_space<vmem>>, vector<16x72xf32>,
    %c0_13 = arith.constant 0 : index
    %c0_14 = arith.constant 0 : index
    %22 = vector.load %arg4[%c0_13, %c0_14] : memref<128x256xf32, #tpu.memory_space<vmem>>, vector<48x160xf32>
    %c0_15 = arith.constant 0 : index
    %c0_16 = arith.constant 0 : index
    %23 = vector.load %arg5[%c0_15, %c0_16] : memref<65x128xf32, #tpu.memory_space<vmem>>, vector<48x1xf32>
    %c0_17 = arith.constant 0 : index
    %c0_18 = arith.constant 0 : index
    %24 = vector.load %arg7[%c0_17, %c0_18] : memref<160x72xf32, #tpu.memory_space<vmem>>, vector<160x72xf32>
    %cst = arith.constant dense<0.000000e+00> : vector<48x72xf32>
    %25 = tpu.matmul %22, %24, %cst {dimension_numbers = #tpu.dot_dimension_numbers<[1], [0], [0], [1], [0, 0, 1, 1], [], []>} : vector<48x160xf32>, vector<160x72xf32>, vector<48x72xf32> -> vector<48x72xf32>
    %26 = vector.broadcast %23 : vector<48x1xf32> to vector<48x72xf32>
    %27 = arith.addf %25, %26 : vector<48x72xf32>
    %cst_19 = arith.constant 0.000000e+00 : f32
    %28 = vector.broadcast %cst_19 : f32 to vector<48x72xf32>
    %29 = arith.cmpf ogt, %27, %28 : vector<48x72xf32>
    %cst_20 = arith.constant 0.000000e+00 : f32
    %30 = vector.broadcast %cst_20 : f32 to vector<48x72xf32>
    %31 = arith.minimumf %27, %30 : vector<48x72xf32>
    %32 = math.exp %31 : vector<48x72xf32>
    %cst_21 = arith.constant 1.000000e+00 : f32
    %33 = vector.broadcast %cst_21 : f32 to vector<48x72xf32>
    %34 = arith.subf %32, %33 : vector<48x72xf32>
    %35 = arith.select %29, %27, %34 : vector<48x72xi1>, vector<48x72xf32>
    %c48_22 = arith.constant 48 : index
    %c0_23 = arith.constant 0 : index
    %36 = vector.load %arg4[%c48_22, %c0_23] : memref<128x256xf32, #tpu.memory_space<vmem>>, vector<64x48xf32>
    %cst_24 = arith.constant dense<0.000000e+00> : vector<64x72xf32>
    %37 = tpu.matmul %36, %35, %cst_24 {dimension_numbers = #tpu.dot_dimension_numbers<[1], [0], [0], [1], [0, 0, 1, 1], [], []>} : vector<64x48xf32>, vector<48x72xf32>, vector<64x72xf32> -> vector<64x72xf32>
    %38 = vector.extract_strided_slice %37 {offsets = [0, 0], sizes = [16, 72], strides = [1, 1]} : vector<64x72xf32> to vector<16x72xf32>
    %c0_25 = arith.constant 0 : index
    %c0_26 = arith.constant 0 : index
    %c0_27 = arith.constant 0 : index
    %39 = vector.load %arg2[%c0_25, %c0_26, %c0_27] : memref<4x72x12xf32, #tpu.memory_space<vmem>>, vector<1x72x12xf32>
    %40 = vector.shape_cast %39 : vector<1x72x12xf32> to vector<72x12xf32>
    %cst_28 = arith.constant dense<0.000000e+00> : vector<16x12xf32>
    %41 = tpu.matmul %38, %40, %cst_28 {dimension_numbers = #tpu.dot_dimension_numbers<[1], [0], [0], [1], [0, 0, 1, 1], [], []>} : vector<16x72xf32>, vector<72x12xf32>, vector<16x12xf32> -> vector<16x12xf32>
    %42 = vector.extract_strided_slice %37 {offsets = [16, 0], sizes = [16, 72], strides = [1, 1]} : vector<64x72xf32> to vector<16x72xf32>
    %c1 = arith.constant 1 : index
    %c0_29 = arith.constant 0 : index
    %c0_30 = arith.constant 0 : index
    %43 = vector.load %arg2[%c1, %c0_29, %c0_30] : memref<4x72x12xf32, #tpu.memory_space<vmem>>, vector<1x72x12xf32>
    %44 = vector.shape_cast %43 : vector<1x72x12xf32> to vector<72x12xf32>
    %cst_31 = arith.constant dense<0.000000e+00> : vector<16x12xf32>
    %45 = tpu.matmul %42, %44, %cst_31 {dimension_numbers = #tpu.dot_dimension_numbers<[1], [0], [0], [1], [0, 0, 1, 1], [], []>} : vector<16x72xf32>, vector<72x12xf32>, vector<16x12xf32> -> vector<16x12xf32>
    %46 = arith.addf %41, %45 : vector<16x12xf32>
    %47 = vector.extract_strided_slice %37 {offsets = [32, 0], sizes = [16, 72], strides = [1, 1]} : vector<64x72xf32> to vector<16x72xf32>
    %c2 = arith.constant 2 : index
    %c0_32 = arith.constant 0 : index
    %c0_33 = arith.constant 0 : index
    %48 = vector.load %arg2[%c2, %c0_32, %c0_33] : memref<4x72x12xf32, #tpu.memory_space<vmem>>, vector<1x72x12xf32>
    %49 = vector.shape_cast %48 : vector<1x72x12xf32> to vector<72x12xf32>
    %cst_34 = arith.constant dense<0.000000e+00> : vector<16x12xf32>
    %50 = tpu.matmul %47, %49, %cst_34 {dimension_numbers = #tpu.dot_dimension_numbers<[1], [0], [0], [1], [0, 0, 1, 1], [], []>} : vector<16x72xf32>, vector<72x12xf32>, vector<16x12xf32> -> vector<16x12xf32>
    %51 = arith.addf %46, %50 : vector<16x12xf32>
    %52 = vector.extract_strided_slice %37 {offsets = [48, 0], sizes = [16, 72], strides = [1, 1]} : vector<64x72xf32> to vector<16x72xf32>
    %c3 = arith.constant 3 : index
    %c0_35 = arith.constant 0 : index
    %c0_36 = arith.constant 0 : index
    %53 = vector.load %arg2[%c3, %c0_35, %c0_36] : memref<4x72x12xf32, #tpu.memory_space<vmem>>, vector<1x72x12xf32>
    %54 = vector.shape_cast %53 : vector<1x72x12xf32> to vector<72x12xf32>
    %cst_37 = arith.constant dense<0.000000e+00> : vector<16x12xf32>
    %55 = tpu.matmul %52, %54, %cst_37 {dimension_numbers = #tpu.dot_dimension_numbers<[1], [0], [0], [1], [0, 0, 1, 1], [], []>} : vector<16x72xf32>, vector<72x12xf32>, vector<16x12xf32> -> vector<16x12xf32>
    %56 = arith.addf %51, %55 : vector<16x12xf32>
    %c48_38 = arith.constant 48 : index
    %c0_39 = arith.constant 0 : index
    %57 = vector.load %arg5[%c48_38, %c0_39] : memref<65x128xf32, #tpu.memory_space<vmem>>, vector<16x1xf32>
    %58 = vector.broadcast %57 : vector<16x1xf32> to vector<16x12xf32>
    %59 = arith.addf %56, %58 : vector<16x12xf32>
    %cst_40 = arith.constant 0.000000e+00 : f32
    %60 = vector.broadcast %cst_40 : f32 to vector<16x12xf32>
    %61 = arith.cmpf ogt, %59, %60 : vector<16x12xf32>
    %cst_41 = arith.constant 0.000000e+00 : f32
    %62 = vector.broadcast %cst_41 : f32 to vector<16x12xf32>
    %63 = arith.minimumf %59, %62 : vector<16x12xf32>
    %64 = math.exp %63 : vector<16x12xf32>
    %cst_42 = arith.constant 1.000000e+00 : f32
    %65 = vector.broadcast %cst_42 : f32 to vector<16x12xf32>
    %66 = arith.subf %64, %65 : vector<16x12xf32>
    %67 = arith.select %61, %59, %66 : vector<16x12xi1>, vector<16x12xf32>
    %c0_43 = arith.constant 0 : index
    %c0_44 = arith.constant 0 : index
    %68 = vector.load %arg3[%c0_43, %c0_44] : memref<12x16xf32, #tpu.memory_space<vmem>>, vector<12x16xf32>
    %cst_45 = arith.constant dense<0.000000e+00> : vector<16x16xf32>
    %69 = tpu.matmul %67, %68, %cst_45 {dimension_numbers = #tpu.dot_dimension_numbers<[1], [0], [0], [1], [0, 0, 1, 1], [], []>} : vector<16x12xf32>, vector<12x16xf32>, vector<16x16xf32> -> vector<16x16xf32>
    %c112_46 = arith.constant 112 : index
    %c0_47 = arith.constant 0 : index
    %70 = vector.load %arg4[%c112_46, %c0_47] : memref<128x256xf32, #tpu.memory_space<vmem>>, vector<16x256xf32>
    %71 = tpu.transpose %69, [1, 0] : vector<16x16xf32> -> vector<16x16xf32>
    %cst_48 = arith.constant dense<0.000000e+00> : vector<16x256xf32>
    %72 = tpu.matmul %71, %70, %cst_48 {dimension_numbers = #tpu.dot_dimension_numbers<[1], [0], [0], [1], [0, 0, 1, 1], [], []>} : vector<16x16xf32>, vector<16x256xf32>, vector<16x256xf32> -> vector<16x256xf32>
    %c64_49 = arith.constant 64 : index
    %c0_50 = arith.constant 0 : index
    %73 = vector.load %arg5[%c64_49, %c0_50] : memref<65x128xf32, #tpu.memory_space<vmem>>, vector<1x128xf32>
    %74 = vector.extract_strided_slice %72 {offsets = [0, 0], sizes = [8, 128], strides = [1, 1]} : vector<16x256xf32> to vector<8x128xf32>
    %75 = vector.broadcast %73 : vector<1x128xf32> to vector<8x128xf32>
    %76 = arith.addf %75, %74 : vector<8x128xf32>
    %77 = vector.extract_strided_slice %72 {offsets = [8, 128], sizes = [8, 128], strides = [1, 1]} : vector<16x256xf32> to vector<8x128xf32>
    %78 = arith.addf %76, %77 : vector<8x128xf32>
    %cst_51 = arith.constant dense<0xFF800000> : vector<8xf32>
    %79 = vector.multi_reduction <maximumf>, %78, %cst_51 [1] : vector<8x128xf32> to vector<8xf32>
    %80 = vector.shape_cast %79 : vector<8xf32> to vector<8x1xf32>
    %81 = vector.broadcast %80 : vector<8x1xf32> to vector<8x128xf32>
    %82 = arith.subf %78, %81 : vector<8x128xf32>
    %83 = math.exp %82 : vector<8x128xf32>
    %cst_52 = arith.constant dense<0.000000e+00> : vector<8xf32>
    %84 = vector.multi_reduction <add>, %83, %cst_52 [1] : vector<8x128xf32> to vector<8xf32>
    %85 = vector.shape_cast %84 : vector<8xf32> to vector<8x1xf32>
    %86 = tpu.reciprocal %85 : vector<8x1xf32> -> vector<8x1xf32>
    %87 = vector.broadcast %86 : vector<8x1xf32> to vector<8x128xf32>
    %88 = arith.mulf %83, %87 : vector<8x128xf32>
    %c0_53 = arith.constant 0 : index
    %c0_54 = arith.constant 0 : index
    %c0_55 = arith.constant 0 : index
    %89 = vector.load %arg6[%c0_53, %c0_54, %c0_55] : memref<1x8x128xf32, #tpu.memory_space<vmem>>, vector<1x8x128xf32>
    %90 = vector.shape_cast %89 : vector<1x8x128xf32> to vector<8x128xf32>
    %91 = vector.shape_cast %88 : vector<8x128xf32> to vector<1x8x128xf32>
    tpu.vector_store %arg6[%c0_53, %c0_54, %c0_55], %91 {strides = array<i32>} : memref<1x8x128xf32, #tpu.memory_space<vmem>>, vector<1x8x128xf32>,
    return
  }
  func.func @transform_0(%arg0: i32) -> (i32, i32, i32) {
    %c0_i32 = arith.constant 0 : i32
    %c0_i32_0 = arith.constant 0 : i32
    %c0_i32_1 = arith.constant 0 : i32
    return %arg0, %c0_i32, %c0_i32_0 : i32, i32, i32
  }
  func.func @transform_1(%arg0: i32) -> (i32, i32, i32) {
    %c0_i32 = arith.constant 0 : i32
    %c0_i32_0 = arith.constant 0 : i32
    %c0_i32_1 = arith.constant 0 : i32
    %c0_i32_2 = arith.constant 0 : i32
    return %c0_i32, %c0_i32_0, %c0_i32_1 : i32, i32, i32
  }
  func.func @transform_2(%arg0: i32) -> (i32, i32) {
    %c0_i32 = arith.constant 0 : i32
    %c0_i32_0 = arith.constant 0 : i32
    %c0_i32_1 = arith.constant 0 : i32
    return %c0_i32, %c0_i32_0 : i32, i32
  }
  func.func @transform_3(%arg0: i32) -> (i32, i32) {
    %c0_i32 = arith.constant 0 : i32
    %c0_i32_0 = arith.constant 0 : i32
    %c0_i32_1 = arith.constant 0 : i32
    return %c0_i32, %c0_i32_0 : i32, i32
  }
  func.func @transform_4(%arg0: i32) -> (i32, i32) {
    %c0_i32 = arith.constant 0 : i32
    %c0_i32_0 = arith.constant 0 : i32
    %c0_i32_1 = arith.constant 0 : i32
    return %c0_i32, %c0_i32_0 : i32, i32
  }
  func.func @transform_5(%arg0: i32) -> (i32, i32, i32) {
    %c0_i32 = arith.constant 0 : i32
    %c0_i32_0 = arith.constant 0 : i32
    %c0_i32_1 = arith.constant 0 : i32
    return %arg0, %c0_i32, %c0_i32_0 : i32, i32, i32
  }
}

</mosaic_0001>

<llo_original>
// kernel: tpu_custom_call.1
$region0: #{tpu_custom_call.1}
  #allocation0 [shape = 'u32[]', space=smem, size = 0x4, offset = 0x4, fixed_abs, tag = 'smem constant byte address 0x4 - core index']
  #allocation1 [shape = 'u32[144,128]{1,0:T(1,128)}', space=vmem, size = 0x12000, scoped, tag = 'internal scratch']
  #allocation2 [shape = 'f32[160,72]{1,0:T(8,128)}', space=vmem, size = 0x14000, scoped, tag = 'scratch operand']
  %s0 = inlined_call_operand.vmem [shape: f32[1,16,81], index: 0, kind: input, shape index: {}]
  %s1 = inlined_call_operand.vmem [shape: f32[4,72,12], index: 1, kind: input, shape index: {}]
  %s2 = inlined_call_operand.hbm [shape: f32[12,16], index: 2, kind: input, shape index: {}]
  %s3 = inlined_call_operand.vmem [shape: f32[128,256], index: 3, kind: input, shape index: {}]
  %s4 = inlined_call_operand.vmem [shape: f32[65,128], index: 4, kind: input, shape index: {}]
  %s5 = inlined_call_operand.hbm [shape: f32[1,8,128], index: 5, kind: output, shape index: {}]
  %s6 = sld [smem:[#allocation0]]
  $region34: #{tpu_custom_call.1} parent=0
    _
  %s8 = ssub.s32 1, %s6
  %s9 = scalar_select 0, %s8, %s6
  $region1: #{tpu_custom_call.1} parent=0
    #allocation3 [shape = 'u8[8192]{0}', space=vmem, size = 0x2000, scoped, tag = 'input window, operand 2, single buffered']
    #allocation4 [shape = 's32[1]{0}', space=sflag, size = 0x4, scoped, tag = 'scoped memory for tpu_custom_call.1']
    #allocation5 [shape = 's32[1]{0}', space=sflag, size = 0x4, scoped, tag = 'scoped memory for tpu_custom_call.1']
    #allocation6 [shape = 'u8[4096]{0}', space=vmem, size = 0x1000, scoped, tag = 'output window, operand 0, single buffered']
    %10 = vsyncpa [#allocation4], 0
    %11 = vsyncpa [#allocation5], 0
    // Predicated region
    $region2: #{tpu_custom_call.1} parent=1 // pred_check
      _
    $region3: #{tpu_custom_call.1} parent=1 // pred_check_branch
      %13 = sbr.rel (0) target = $region5
    $region4: #{tpu_custom_call.1} parent=1 // pred_region
      _
    $region5: #{tpu_custom_call.1} parent=1 // pred_fallthru
      _
    // Predicated region
    $region6: #{tpu_custom_call.1} parent=1 // pred_check
      _
    $region7: #{tpu_custom_call.1} parent=1 // pred_check_branch
      %15 = sbr.rel (0) target = $region9
    $region8: #{tpu_custom_call.1} parent=1 // pred_region
      _
    $region9: #{tpu_custom_call.1} parent=1 // pred_fallthru
      _
    // Predicated region
    $region10: #{tpu_custom_call.1} parent=1 // pred_check
      _
    $region11: #{tpu_custom_call.1} parent=1 // pred_check_branch
      %17 = sbr.rel (0) target = $region13
    $region12: #{tpu_custom_call.1} parent=1 // pred_region
      %s19 = ssub.s32 256, 256
      %20 = vsyncadd [#allocation4], %s19
      %s21 = sshll.u32 [#allocation3], 4
      %s22 = int_to_ptr.vmem [resolvable:$true] %s21
      %27 = dma.hbm_to_vmem [thread:$0]  %s2, 256, %s22, [#allocation4], 128, 128, 8
    $region13: #{tpu_custom_call.1} parent=1 // pred_fallthru
      _
    // Predicated region
    $region14: #{tpu_custom_call.1} parent=1 // pred_check
      _
    $region15: #{tpu_custom_call.1} parent=1 // pred_check_branch
      %29 = sbr.rel (0) target = $region17
    $region16: #{tpu_custom_call.1} parent=1 // pred_region
      _
    $region17: #{tpu_custom_call.1} parent=1 // pred_fallthru
      _
    // Predicated region
    $region18: #{tpu_custom_call.1} parent=1 // pred_check
      _
    $region19: #{tpu_custom_call.1} parent=1 // pred_check_branch
      %31 = sbr.rel (0) target = $region21
    $region20: #{tpu_custom_call.1} parent=1 // pred_region
      _
    $region21: #{tpu_custom_call.1} parent=1 // pred_fallthru
      _
    // Predicated region
    $region22: #{tpu_custom_call.1} parent=1 // pred_check
      _
    $region23: #{tpu_custom_call.1} parent=1 // pred_check_branch
      %33 = sbr.rel (0) target = $region25
    $region24: #{tpu_custom_call.1} parent=1 // pred_region
      %34 = dma.done [#allocation4], 256
    $region25: #{tpu_custom_call.1} parent=1 // pred_fallthru
      _
    %v35 = vld [vmem:[%s0] sm:$0xff]
    %v36 = vld [vmem:[%s0 + $0x8] sm:$0xff]
    %vm37 = vcmask 588800
    %38 = vst.msk [vmem:[#allocation2] sm:$0xff] %vm37, %v35
    %39 = vst.msk [vmem:[#allocation2 + $0x8] sm:$0xff] %vm37, %v36
    %42 = vrot.lane.b32.xlu0 %v35, 127
    %v43 = vpop.permute.xlu0 %42
    %44 = vrot.lane.b32.xlu0 %v36, 127
    %v45 = vpop.permute.xlu0 %44
    %48 = vst.msk [vmem:[#allocation2 + $0x10] sm:$0xff] %vm37, %v43
    %49 = vst.msk [vmem:[#allocation2 + $0x18] sm:$0xff] %vm37, %v45
    %50 = vrot.lane.b32.xlu0 %v35, 126
    %v51 = vpop.permute.xlu0 %50
    %52 = vrot.lane.b32.xlu0 %v36, 126
    %v53 = vpop.permute.xlu0 %52
    %56 = vst.msk [vmem:[#allocation2 + $0x20] sm:$0xff] %vm37, %v51
    %57 = vst.msk [vmem:[#allocation2 + $0x28] sm:$0xff] %vm37, %v53
    %58 = vrot.lane.b32.xlu0 %v35, 125
    %v59 = vpop.permute.xlu0 %58
    %60 = vrot.lane.b32.xlu0 %v36, 125
    %v61 = vpop.permute.xlu0 %60
    %64 = vst.msk [vmem:[#allocation2 + $0x30] sm:$0xff] %vm37, %v59
    %65 = vst.msk [vmem:[#allocation2 + $0x38] sm:$0xff] %vm37, %v61
    %66 = vrot.lane.b32.xlu0 %v35, 124
    %v67 = vpop.permute.xlu0 %66
    %68 = vrot.lane.b32.xlu0 %v36, 124
    %v69 = vpop.permute.xlu0 %68
    %72 = vst.msk [vmem:[#allocation2 + $0x40] sm:$0xff] %vm37, %v67
    %73 = vst.msk [vmem:[#allocation2 + $0x48] sm:$0xff] %vm37, %v69
    %74 = vrot.lane.b32.xlu0 %v35, 123
    %v75 = vpop.permute.xlu0 %74
    %76 = vrot.lane.b32.xlu0 %v36, 123
    %v77 = vpop.permute.xlu0 %76
    %80 = vst.msk [vmem:[#allocation2 + $0x50] sm:$0xff] %vm37, %v75
    %81 = vst.msk [vmem:[#allocation2 + $0x58] sm:$0xff] %vm37, %v77
    %82 = vrot.lane.b32.xlu0 %v35, 122
    %v83 = vpop.permute.xlu0 %82
    %84 = vrot.lane.b32.xlu0 %v36, 122
    %v85 = vpop.permute.xlu0 %84
    %88 = vst.msk [vmem:[#allocation2 + $0x60] sm:$0xff] %vm37, %v83
    %89 = vst.msk [vmem:[#allocation2 + $0x68] sm:$0xff] %vm37, %v85
    %90 = vrot.lane.b32.xlu0 %v35, 121
    %v91 = vpop.permute.xlu0 %90
    %92 = vrot.lane.b32.xlu0 %v36, 121
    %v93 = vpop.permute.xlu0 %92
    %96 = vst.msk [vmem:[#allocation2 + $0x70] sm:$0xff] %vm37, %v91
    %97 = vst.msk [vmem:[#allocation2 + $0x78] sm:$0xff] %vm37, %v93
    %98 = vrot.lane.b32.xlu0 %v35, 120
    %v99 = vpop.permute.xlu0 %98
    %100 = vrot.lane.b32.xlu0 %v36, 120
    %v101 = vpop.permute.xlu0 %100
    %104 = vst.msk [vmem:[#allocation2 + $0x80] sm:$0xff] %vm37, %v99
    %105 = vst.msk [vmem:[#allocation2 + $0x88] sm:$0xff] %vm37, %v101
    %106 = vrot.lane.b32.xlu0 %v35, 119
    %v107 = vpop.permute.xlu0 %106
    %108 = vrot.lane.b32.xlu0 %v36, 119
    %v109 = vpop.permute.xlu0 %108
    %112 = vst.msk [vmem:[#allocation2 + $0x90] sm:$0xff] %vm37, %v107
    %113 = vst.msk [vmem:[#allocation2 + $0x98] sm:$0xff] %vm37, %v109
    %v114 = vld [vmem:[%s3] sm:$0xff]
    %v115 = vld [vmem:[%s3 + $0x8] sm:$0xff]
    %v116 = vld [vmem:[%s3 + $0x10] sm:$0xff]
    %v117 = vld [vmem:[%s3 + $0x18] sm:$0xff]
    %v118 = vld [vmem:[%s3 + $0x20] sm:$0xff]
    %v119 = vld [vmem:[%s3 + $0x28] sm:$0xff]
    %v120 = vld [vmem:[%s3 + $0x30] sm:$0xff]
    %v121 = vld [vmem:[%s3 + $0x38] sm:$0xff]
    %v122 = vld [vmem:[%s3 + $0x40] sm:$0xff]
    %v123 = vld [vmem:[%s3 + $0x48] sm:$0xff]
    %v124 = vld [vmem:[%s3 + $0x50] sm:$0xff]
    %v125 = vld [vmem:[%s3 + $0x58] sm:$0xff]
    %v126 = vld [vmem:[%s4] sm:$0xff]
    %v127 = vld [vmem:[%s4 + $0x8] sm:$0xff]
    %v128 = vld [vmem:[%s4 + $0x10] sm:$0xff]
    %v129 = vld [vmem:[%s4 + $0x18] sm:$0xff]
    %v130 = vld [vmem:[%s4 + $0x20] sm:$0xff]
    %v131 = vld [vmem:[%s4 + $0x28] sm:$0xff]
    %v132 = vld [vmem:[#allocation2] sm:$0xff]
    %v133 = vld [vmem:[#allocation2 + $0x8] sm:$0xff]
    %v134 = vld [vmem:[#allocation2 + $0x10] sm:$0xff]
    %v135 = vld [vmem:[#allocation2 + $0x18] sm:$0xff]
    %v136 = vld [vmem:[#allocation2 + $0x20] sm:$0xff]
    %v137 = vld [vmem:[#allocation2 + $0x28] sm:$0xff]
    %v138 = vld [vmem:[#allocation2 + $0x30] sm:$0xff]
    %v139 = vld [vmem:[#allocation2 + $0x38] sm:$0xff]
    %v140 = vld [vmem:[#allocation2 + $0x40] sm:$0xff]
    %v141 = vld [vmem:[#allocation2 + $0x48] sm:$0xff]
    %v142 = vld [vmem:[#allocation2 + $0x50] sm:$0xff]
    %v143 = vld [vmem:[#allocation2 + $0x58] sm:$0xff]
    %v144 = vld [vmem:[#allocation2 + $0x60] sm:$0xff]
    %v145 = vld [vmem:[#allocation2 + $0x68] sm:$0xff]
    %v146 = vld [vmem:[#allocation2 + $0x70] sm:$0xff]
    %v147 = vld [vmem:[#allocation2 + $0x78] sm:$0xff]
    %v148 = vld [vmem:[#allocation2 + $0x80] sm:$0xff]
    %v149 = vld [vmem:[#allocation2 + $0x88] sm:$0xff]
    %v150 = vld [vmem:[#allocation2 + $0x90] sm:$0xff]
    %v151 = vld [vmem:[#allocation2 + $0x98] sm:$0xff]
    %153 = vset.pattern.permute.xlu0 0
    %154 = vperm.xlu0 %153, %v126
    %v155 = vpop.permute.xlu0 %154
    %158 = vset.pattern.permute.xlu0 0
    %159 = vperm.xlu0 %158, %v127
    %v160 = vpop.permute.xlu0 %159
    %163 = vset.pattern.permute.xlu0 0
    %164 = vperm.xlu0 %163, %v128
    %v165 = vpop.permute.xlu0 %164
    %168 = vset.pattern.permute.xlu0 0
    %169 = vperm.xlu0 %168, %v129
    %v170 = vpop.permute.xlu0 %169
    %173 = vset.pattern.permute.xlu0 0
    %174 = vperm.xlu0 %173, %v130
    %v175 = vpop.permute.xlu0 %174
    %178 = vset.pattern.permute.xlu0 0
    %179 = vperm.xlu0 %178, %v131
    %v180 = vpop.permute.xlu0 %179
    %vm182 = vcmask 261120
    %v184 = vsel %vm182, %v115, 0
    %v187 = vsel %vm182, %v117, 0
    %v190 = vsel %vm182, %v119, 0
    %v193 = vsel %vm182, %v121, 0
    %v196 = vsel %vm182, %v123, 0
    %v199 = vsel %vm182, %v125, 0
    %201 = vmatprep.subr.mxu0 0.0
    %202 = vmatpush1.msra.mxu0 %v132
    %203 = vmatprep.subr.mxu0 0.0
    %204 = vmatpush1.msra.mxu0 %v133
    %205 = vmatprep.subr.mxu0 0.0
    %206 = vmatpush1.msra.mxu0 %v134
    %207 = vmatprep.subr.mxu0 0.0
    %208 = vmatpush1.msra.mxu0 %v135
    %209 = vmatprep.subr.mxu0 0.0
    %210 = vmatpush1.msra.mxu0 %v136
    %211 = vmatprep.subr.mxu0 0.0
    %212 = vmatpush1.msra.mxu0 %v137
    %213 = vmatprep.subr.mxu0 0.0
    %214 = vmatpush1.msra.mxu0 %v138
    %215 = vmatprep.subr.mxu0 0.0
    %216 = vmatpush1.msra.mxu0 %v139
    %217 = vmatprep.subr.mxu0 0.0
    %218 = vmatpush1.msra.mxu0 %v140
    %219 = vmatprep.subr.mxu0 0.0
    %220 = vmatpush1.msra.mxu0 %v141
    %221 = vmatprep.subr.mxu0 0.0
    %222 = vmatpush1.msra.mxu0 %v142
    %223 = vmatprep.subr.mxu0 0.0
    %224 = vmatpush1.msra.mxu0 %v143
    %225 = vmatprep.subr.mxu0 0.0
    %226 = vmatpush1.msra.mxu0 %v144
    %227 = vmatprep.subr.mxu0 0.0
    %228 = vmatpush1.msra.mxu0 %v145
    %229 = vmatprep.subr.mxu0 0.0
    %230 = vmatpush1.msra.mxu0 %v146
    %231 = vmatprep.subr.mxu0 0.0
    %232 = vmatpush1.msra.mxu0 %v147
    %233 = vmatprep.subr.mxu0 0.0
    %234 = vmatpush1.msra.mxu0 %v148
    %235 = vmatprep.subr.mxu0 0.0
    %236 = vmatpush1.msra.mxu0 %v149
    %237 = vmatprep.subr.mxu0 0.0
    %238 = vmatpush1.msra.mxu0 %v150
    %239 = vmatprep.subr.mxu0 0.0
    %240 = vmatpush1.msra.mxu0 %v151
    %241 = vmatprep.subr.mxu0 0.0
    %242 = vmatpush1.msra.mxu0 0.0
    %243 = vmatprep.subr.mxu0 0.0
    %244 = vmatpush1.msra.mxu0 0.0
    %245 = vmatprep.subr.mxu0 0.0
    %246 = vmatpush1.msra.mxu0 0.0
    %247 = vmatprep.subr.mxu0 0.0
    %248 = vmatpush1.msra.mxu0 0.0
    %249 = vmatprep.subr.mxu0 0.0
    %250 = vmatpush1.msra.mxu0 0.0
    %251 = vmatprep.subr.mxu0 0.0
    %252 = vmatpush1.msra.mxu0 0.0
    %253 = vmatprep.subr.mxu0 0.0
    %254 = vmatpush1.msra.mxu0 0.0
    %255 = vmatprep.subr.mxu0 0.0
    %256 = vmatpush1.msra.mxu0 0.0
    %257 = vmatprep.subr.mxu0 0.0
    %258 = vmatpush1.msra.mxu0 0.0
    %259 = vmatprep.subr.mxu0 0.0
    %260 = vmatpush1.msra.mxu0 0.0
    %261 = vmatprep.subr.mxu0 0.0
    %262 = vmatpush1.msra.mxu0 0.0
    %263 = vmatprep.subr.mxu0 0.0
    %264 = vmatpush1.msra.mxu0 0.0
    %265 = vmatprep.mubr.f32.mxu0 %v184
    %266 = vmatmul.mubr.f32.gmra.mrb[0].mxu0 %v114
    %v267 = vpop.f32.mrb[0].mxu0
    %v268 = vadd.f32 %v155, %v267
    %v269 = vpop.f32.mrb[0].mxu0
    %270 = vmatprep.mubr.f32.mxu0 %v187
    %271 = vmatmul.mubr.f32.gmra.mrb[0].mxu0 %v116
    %v272 = vpop.f32.mrb[0].mxu0
    %v273 = vadd.f32 %v160, %v272
    %v274 = vpop.f32.mrb[0].mxu0
    %275 = vmatprep.mubr.f32.mxu0 %v190
    %276 = vmatmul.mubr.f32.gmra.mrb[0].mxu0 %v118
    %v277 = vpop.f32.mrb[0].mxu0
    %v278 = vadd.f32 %v165, %v277
    %v279 = vpop.f32.mrb[0].mxu0
    %280 = vmatprep.mubr.f32.mxu0 %v193
    %281 = vmatmul.mubr.f32.gmra.mrb[0].mxu0 %v120
    %v282 = vpop.f32.mrb[0].mxu0
    %v283 = vadd.f32 %v170, %v282
    %v284 = vpop.f32.mrb[0].mxu0
    %285 = vmatprep.mubr.f32.mxu0 %v196
    %286 = vmatmul.mubr.f32.gmra.mrb[0].mxu0 %v122
    %v287 = vpop.f32.mrb[0].mxu0
    %v288 = vadd.f32 %v175, %v287
    %v289 = vpop.f32.mrb[0].mxu0
    %290 = vmatprep.mubr.f32.mxu0 %v199
    %291 = vmatmul.mubr.f32.gmra.mrb[0].mxu0 %v124
    %v292 = vpop.f32.mrb[0].mxu0
    %v293 = vadd.f32 %v180, %v292
    %v294 = vpop.f32.mrb[0].mxu0
    %295 = vdwg.mxu0
    %vm296 = vcmp.gt.f32.partialorder %v268, 0.0
    %vm297 = vcmp.gt.f32.partialorder %v273, 0.0
    %vm298 = vcmp.gt.f32.partialorder %v278, 0.0
    %vm299 = vcmp.gt.f32.partialorder %v283, 0.0
    %vm300 = vcmp.gt.f32.partialorder %v288, 0.0
    %vm301 = vcmp.gt.f32.partialorder %v293, 0.0
    %v302 = vmin.f32 %v268, 0.0
    %v303 = vmin.f32 %v273, 0.0
    %v304 = vmin.f32 %v278, 0.0
    %v305 = vmin.f32 %v283, 0.0
    %v306 = vmin.f32 %v288, 0.0
    %v307 = vmin.f32 %v293, 0.0
    %v308 = vmul.f32 %v302, 1.442695
    %v309 = vpow.pop %v308
    %v310 = vmul.f32 %v303, 1.442695
    %v311 = vpow.pop %v310
    %v312 = vmul.f32 %v304, 1.442695
    %v313 = vpow.pop %v312
    %v314 = vmul.f32 %v305, 1.442695
    %v315 = vpow.pop %v314
    %v316 = vmul.f32 %v306, 1.442695
    %v317 = vpow.pop %v316
    %v318 = vmul.f32 %v307, 1.442695
    %v319 = vpow.pop %v318
    %v320 = vsub.f32 %v309, 1.0
    %v321 = vsub.f32 %v311, 1.0
    %v322 = vsub.f32 %v313, 1.0
    %v323 = vsub.f32 %v315, 1.0
    %v324 = vsub.f32 %v317, 1.0
    %v325 = vsub.f32 %v319, 1.0
    %v326 = vsel %vm296, %v268, %v320
    %v327 = vsel %vm297, %v273, %v321
    %v328 = vsel %vm298, %v278, %v322
    %v329 = vsel %vm299, %v283, %v323
    %v330 = vsel %vm300, %v288, %v324
    %v331 = vsel %vm301, %v293, %v325
    %v332 = vld [vmem:[%s3 + $0x60] sm:$0xff]
    %v333 = vld [vmem:[%s3 + $0x70] sm:$0xff]
    %v334 = vld [vmem:[%s3 + $0x80] sm:$0xff]
    %v335 = vld [vmem:[%s3 + $0x90] sm:$0xff]
    %v336 = vld [vmem:[%s3 + $0xa0] sm:$0xff]
    %v337 = vld [vmem:[%s3 + $0xb0] sm:$0xff]
    %v338 = vld [vmem:[%s3 + $0xc0] sm:$0xff]
    %v339 = vld [vmem:[%s3 + $0xd0] sm:$0xff]
    %vm340 = vcmask 392192
    %v342 = vsel %vm340, %v332, 0
    %v345 = vsel %vm340, %v333, 0
    %v348 = vsel %vm340, %v334, 0
    %v351 = vsel %vm340, %v335, 0
    %v354 = vsel %vm340, %v336, 0
    %v357 = vsel %vm340, %v337, 0
    %v360 = vsel %vm340, %v338, 0
    %v363 = vsel %vm340, %v339, 0
    %365 = vmatprep.subr.mxu0 0.0
    %366 = vmatpush1.msra.mxu0 %v326
    %367 = vmatprep.subr.mxu0 0.0
    %368 = vmatpush1.msra.mxu0 %v327
    %369 = vmatprep.subr.mxu0 0.0
    %370 = vmatpush1.msra.mxu0 %v328
    %371 = vmatprep.subr.mxu0 0.0
    %372 = vmatpush1.msra.mxu0 %v329
    %373 = vmatprep.subr.mxu0 0.0
    %374 = vmatpush1.msra.mxu0 %v330
    %375 = vmatprep.subr.mxu0 0.0
    %376 = vmatpush1.msra.mxu0 %v331
    %377 = vmatprep.subr.mxu0 0.0
    %378 = vmatpush1.msra.mxu0 0.0
    %379 = vmatprep.subr.mxu0 0.0
    %380 = vmatpush1.msra.mxu0 0.0
    %381 = vmatprep.subr.mxu0 0.0
    %382 = vmatpush1.msra.mxu0 0.0
    %383 = vmatprep.subr.mxu0 0.0
    %384 = vmatpush1.msra.mxu0 0.0
    %385 = vmatprep.subr.mxu0 0.0
    %386 = vmatpush1.msra.mxu0 0.0
    %387 = vmatprep.subr.mxu0 0.0
    %388 = vmatpush1.msra.mxu0 0.0
    %389 = vmatprep.subr.mxu0 0.0
    %390 = vmatpush1.msra.mxu0 0.0
    %391 = vmatprep.subr.mxu0 0.0
    %392 = vmatpush1.msra.mxu0 0.0
    %393 = vmatprep.subr.mxu0 0.0
    %394 = vmatpush1.msra.mxu0 0.0
    %395 = vmatprep.subr.mxu0 0.0
    %396 = vmatpush1.msra.mxu0 0.0
    %397 = vmatprep.subr.mxu0 0.0
    %398 = vmatpush1.msra.mxu0 0.0
    %399 = vmatprep.subr.mxu0 0.0
    %400 = vmatpush1.msra.mxu0 0.0
    %401 = vmatprep.subr.mxu0 0.0
    %402 = vmatpush1.msra.mxu0 0.0
    %403 = vmatprep.subr.mxu0 0.0
    %404 = vmatpush1.msra.mxu0 0.0
    %405 = vmatprep.subr.mxu0 0.0
    %406 = vmatpush1.msra.mxu0 0.0
    %407 = vmatprep.subr.mxu0 0.0
    %408 = vmatpush1.msra.mxu0 0.0
    %409 = vmatprep.subr.mxu0 0.0
    %410 = vmatpush1.msra.mxu0 0.0
    %411 = vmatprep.subr.mxu0 0.0
    %412 = vmatpush1.msra.mxu0 0.0
    %413 = vmatprep.subr.mxu0 0.0
    %414 = vmatpush1.msra.mxu0 0.0
    %415 = vmatprep.subr.mxu0 0.0
    %416 = vmatpush1.msra.mxu0 0.0
    %417 = vmatprep.subr.mxu0 0.0
    %418 = vmatpush1.msra.mxu0 0.0
    %419 = vmatprep.subr.mxu0 0.0
    %420 = vmatpush1.msra.mxu0 0.0
    %421 = vmatprep.subr.mxu0 0.0
    %422 = vmatpush1.msra.mxu0 0.0
    %423 = vmatprep.subr.mxu0 0.0
    %424 = vmatpush1.msra.mxu0 0.0
    %425 = vmatprep.subr.mxu0 0.0
    %426 = vmatpush1.msra.mxu0 0.0
    %427 = vmatprep.subr.mxu0 0.0
    %428 = vmatpush1.msra.mxu0 0.0
    %429 = vmatprep.mubr.f32.mxu0 0.0
    %430 = vmatmul.mubr.f32.gmra.mrb[0].mxu0 %v342
    %v431 = vpop.f32.mrb[0].mxu0
    %v432 = vadd.f32 0.0, %v431
    %v433 = vpop.f32.mrb[0].mxu0
    %434 = vmatprep.mubr.f32.mxu0 0.0
    %435 = vmatmul.mubr.f32.gmra.mrb[0].mxu0 %v345
    %v436 = vpop.f32.mrb[0].mxu0
    %v437 = vadd.f32 0.0, %v436
    %v438 = vpop.f32.mrb[0].mxu0
    %439 = vmatprep.mubr.f32.mxu0 0.0
    %440 = vmatmul.mubr.f32.gmra.mrb[0].mxu0 %v348
    %v441 = vpop.f32.mrb[0].mxu0
    %v442 = vadd.f32 0.0, %v441
    %v443 = vpop.f32.mrb[0].mxu0
    %444 = vmatprep.mubr.f32.mxu0 0.0
    %445 = vmatmul.mubr.f32.gmra.mrb[0].mxu0 %v351
    %v446 = vpop.f32.mrb[0].mxu0
    %v447 = vadd.f32 0.0, %v446
    %v448 = vpop.f32.mrb[0].mxu0
    %449 = vmatprep.mubr.f32.mxu0 0.0
    %450 = vmatmul.mubr.f32.gmra.mrb[0].mxu0 %v354
    %v451 = vpop.f32.mrb[0].mxu0
    %v452 = vadd.f32 0.0, %v451
    %v453 = vpop.f32.mrb[0].mxu0
    %454 = vmatprep.mubr.f32.mxu0 0.0
    %455 = vmatmul.mubr.f32.gmra.mrb[0].mxu0 %v357
    %v456 = vpop.f32.mrb[0].mxu0
    %v457 = vadd.f32 0.0, %v456
    %v458 = vpop.f32.mrb[0].mxu0
    %459 = vmatprep.mubr.f32.mxu0 0.0
    %460 = vmatmul.mubr.f32.gmra.mrb[0].mxu0 %v360
    %v461 = vpop.f32.mrb[0].mxu0
    %v462 = vadd.f32 0.0, %v461
    %v463 = vpop.f32.mrb[0].mxu0
    %464 = vmatprep.mubr.f32.mxu0 0.0
    %465 = vmatmul.mubr.f32.gmra.mrb[0].mxu0 %v363
    %v466 = vpop.f32.mrb[0].mxu0
    %v467 = vadd.f32 0.0, %v466
    %v468 = vpop.f32.mrb[0].mxu0
    %469 = vdwg.mxu0
    %v470 = vld [vmem:[%s1] sm:$0xff]
    %v471 = vld [vmem:[%s1 + $0x8] sm:$0xff]
    %v472 = vld [vmem:[%s1 + $0x10] sm:$0xff]
    %v473 = vld [vmem:[%s1 + $0x18] sm:$0xff]
    %v474 = vld [vmem:[%s1 + $0x20] sm:$0xff]
    %v475 = vld [vmem:[%s1 + $0x28] sm:$0xff]
    %v476 = vld [vmem:[%s1 + $0x30] sm:$0xff]
    %v477 = vld [vmem:[%s1 + $0x38] sm:$0xff]
    %v478 = vld [vmem:[%s1 + $0x40] sm:$0xff]
    %s479 = scalar_lea.vmem %s1, 72
    %v480 = vld [vmem:[%s479] sm:$0xff]
    %v481 = vld [vmem:[%s479 + $0x8] sm:$0xff]
    %v482 = vld [vmem:[%s479 + $0x10] sm:$0xff]
    %v483 = vld [vmem:[%s479 + $0x18] sm:$0xff]
    %v484 = vld [vmem:[%s479 + $0x20] sm:$0xff]
    %v485 = vld [vmem:[%s479 + $0x28] sm:$0xff]
    %v486 = vld [vmem:[%s479 + $0x30] sm:$0xff]
    %v487 = vld [vmem:[%s479 + $0x38] sm:$0xff]
    %v488 = vld [vmem:[%s479 + $0x40] sm:$0xff]
    %v490 = vsel %vm37, %v442, 0
    %v493 = vsel %vm37, %v447, 0
    %495 = vmatprep.subr.mxu0 0.0
    %496 = vmatpush1.msra.mxu0 %v480
    %497 = vmatprep.subr.mxu0 0.0
    %498 = vmatpush1.msra.mxu0 %v481
    %499 = vmatprep.subr.mxu0 0.0
    %500 = vmatpush1.msra.mxu0 %v482
    %501 = vmatprep.subr.mxu0 0.0
    %502 = vmatpush1.msra.mxu0 %v483
    %503 = vmatprep.subr.mxu0 0.0
    %504 = vmatpush1.msra.mxu0 %v484
    %505 = vmatprep.subr.mxu0 0.0
    %506 = vmatpush1.msra.mxu0 %v485
    %507 = vmatprep.subr.mxu0 0.0
    %508 = vmatpush1.msra.mxu0 %v486
    %509 = vmatprep.subr.mxu0 0.0
    %510 = vmatpush1.msra.mxu0 %v487
    %511 = vmatprep.subr.mxu0 0.0
    %512 = vmatpush1.msra.mxu0 %v488
    %513 = vmatprep.subr.mxu0 0.0
    %514 = vmatpush1.msra.mxu0 0.0
    %515 = vmatprep.subr.mxu0 0.0
    %516 = vmatpush1.msra.mxu0 0.0
    %517 = vmatprep.subr.mxu0 0.0
    %518 = vmatpush1.msra.mxu0 0.0
    %519 = vmatprep.subr.mxu0 0.0
    %520 = vmatpush1.msra.mxu0 0.0
    %521 = vmatprep.subr.mxu0 0.0
    %522 = vmatpush1.msra.mxu0 0.0
    %523 = vmatprep.subr.mxu0 0.0
    %524 = vmatpush1.msra.mxu0 0.0
    %525 = vmatprep.subr.mxu0 0.0
    %526 = vmatpush1.msra.mxu0 0.0
    %527 = vmatprep.subr.mxu0 0.0
    %528 = vmatpush1.msra.mxu0 0.0
    %529 = vmatprep.subr.mxu0 0.0
    %530 = vmatpush1.msra.mxu0 0.0
    %531 = vmatprep.subr.mxu0 0.0
    %532 = vmatpush1.msra.mxu0 0.0
    %533 = vmatprep.subr.mxu0 0.0
    %534 = vmatpush1.msra.mxu0 0.0
    %535 = vmatprep.subr.mxu0 0.0
    %536 = vmatpush1.msra.mxu0 0.0
    %537 = vmatprep.subr.mxu0 0.0
    %538 = vmatpush1.msra.mxu0 0.0
    %539 = vmatprep.subr.mxu0 0.0
    %540 = vmatpush1.msra.mxu0 0.0
    %541 = vmatprep.subr.mxu0 0.0
    %542 = vmatpush1.msra.mxu0 0.0
    %543 = vmatprep.subr.mxu0 0.0
    %544 = vmatpush1.msra.mxu0 0.0
    %545 = vmatprep.subr.mxu0 0.0
    %546 = vmatpush1.msra.mxu0 0.0
    %547 = vmatprep.subr.mxu0 0.0
    %548 = vmatpush1.msra.mxu0 0.0
    %549 = vmatprep.subr.mxu0 0.0
    %550 = vmatpush1.msra.mxu0 0.0
    %551 = vmatprep.subr.mxu0 0.0
    %552 = vmatpush1.msra.mxu0 0.0
    %553 = vmatprep.subr.mxu0 0.0
    %554 = vmatpush1.msra.mxu0 0.0
    %555 = vmatprep.subr.mxu0 0.0
    %556 = vmatpush1.msra.mxu0 0.0
    %557 = vmatprep.subr.mxu0 0.0
    %558 = vmatpush1.msra.mxu0 0.0
    %559 = vmatprep.mubr.f32.mxu0 0.0
    %560 = vmatmul.mubr.f32.gmra.mrb[0].mxu0 %v490
    %v561 = vpop.f32.mrb[0].mxu0
    %v562 = vadd.f32 0.0, %v561
    %v563 = vpop.f32.mrb[0].mxu0
    %564 = vmatprep.mubr.f32.mxu0 0.0
    %565 = vmatmul.mubr.f32.gmra.mrb[0].mxu0 %v493
    %v566 = vpop.f32.mrb[0].mxu0
    %v567 = vadd.f32 0.0, %v566
    %v568 = vpop.f32.mrb[0].mxu0
    %569 = vdwg.mxu0
    %v571 = vsel %vm37, %v432, 0
    %v574 = vsel %vm37, %v437, 0
    %576 = vmatprep.subr.mxu0 0.0
    %577 = vmatpush1.msra.mxu0 %v470
    %578 = vmatprep.subr.mxu0 0.0
    %579 = vmatpush1.msra.mxu0 %v471
    %580 = vmatprep.subr.mxu0 0.0
    %581 = vmatpush1.msra.mxu0 %v472
    %582 = vmatprep.subr.mxu0 0.0
    %583 = vmatpush1.msra.mxu0 %v473
    %584 = vmatprep.subr.mxu0 0.0
    %585 = vmatpush1.msra.mxu0 %v474
    %586 = vmatprep.subr.mxu0 0.0
    %587 = vmatpush1.msra.mxu0 %v475
    %588 = vmatprep.subr.mxu0 0.0
    %589 = vmatpush1.msra.mxu0 %v476
    %590 = vmatprep.subr.mxu0 0.0
    %591 = vmatpush1.msra.mxu0 %v477
    %592 = vmatprep.subr.mxu0 0.0
    %593 = vmatpush1.msra.mxu0 %v478
    %594 = vmatprep.subr.mxu0 0.0
    %595 = vmatpush1.msra.mxu0 0.0
    %596 = vmatprep.subr.mxu0 0.0
    %597 = vmatpush1.msra.mxu0 0.0
    %598 = vmatprep.subr.mxu0 0.0
    %599 = vmatpush1.msra.mxu0 0.0
    %600 = vmatprep.subr.mxu0 0.0
    %601 = vmatpush1.msra.mxu0 0.0
    %602 = vmatprep.subr.mxu0 0.0
    %603 = vmatpush1.msra.mxu0 0.0
    %604 = vmatprep.subr.mxu0 0.0
    %605 = vmatpush1.msra.mxu0 0.0
    %606 = vmatprep.subr.mxu0 0.0
    %607 = vmatpush1.msra.mxu0 0.0
    %608 = vmatprep.subr.mxu0 0.0
    %609 = vmatpush1.msra.mxu0 0.0
    %610 = vmatprep.subr.mxu0 0.0
    %611 = vmatpush1.msra.mxu0 0.0
    %612 = vmatprep.subr.mxu0 0.0
    %613 = vmatpush1.msra.mxu0 0.0
    %614 = vmatprep.subr.mxu0 0.0
    %615 = vmatpush1.msra.mxu0 0.0
    %616 = vmatprep.subr.mxu0 0.0
    %617 = vmatpush1.msra.mxu0 0.0
    %618 = vmatprep.subr.mxu0 0.0
    %619 = vmatpush1.msra.mxu0 0.0
    %620 = vmatprep.subr.mxu0 0.0
    %621 = vmatpush1.msra.mxu0 0.0
    %622 = vmatprep.subr.mxu0 0.0
    %623 = vmatpush1.msra.mxu0 0.0
    %624 = vmatprep.subr.mxu0 0.0
    %625 = vmatpush1.msra.mxu0 0.0
    %626 = vmatprep.subr.mxu0 0.0
    %627 = vmatpush1.msra.mxu0 0.0
    %628 = vmatprep.subr.mxu0 0.0
    %629 = vmatpush1.msra.mxu0 0.0
    %630 = vmatprep.subr.mxu0 0.0
    %631 = vmatpush1.msra.mxu0 0.0
    %632 = vmatprep.subr.mxu0 0.0
    %633 = vmatpush1.msra.mxu0 0.0
    %634 = vmatprep.subr.mxu0 0.0
    %635 = vmatpush1.msra.mxu0 0.0
    %636 = vmatprep.subr.mxu0 0.0
    %637 = vmatpush1.msra.mxu0 0.0
    %638 = vmatprep.subr.mxu0 0.0
    %639 = vmatpush1.msra.mxu0 0.0
    %640 = vmatprep.mubr.f32.mxu0 0.0
    %641 = vmatmul.mubr.f32.gmra.mrb[0].mxu0 %v571
    %v642 = vpop.f32.mrb[0].mxu0
    %v643 = vadd.f32 %v562, %v642
    %v644 = vpop.f32.mrb[0].mxu0
    %645 = vmatprep.mubr.f32.mxu0 0.0
    %646 = vmatmul.mubr.f32.gmra.mrb[0].mxu0 %v574
    %v647 = vpop.f32.mrb[0].mxu0
    %v648 = vadd.f32 %v567, %v647
    %v649 = vpop.f32.mrb[0].mxu0
    %650 = vdwg.mxu0
    %s651 = scalar_lea.vmem %s1, 144
    %v652 = vld [vmem:[%s651] sm:$0xff]
    %v653 = vld [vmem:[%s651 + $0x8] sm:$0xff]
    %v654 = vld [vmem:[%s651 + $0x10] sm:$0xff]
    %v655 = vld [vmem:[%s651 + $0x18] sm:$0xff]
    %v656 = vld [vmem:[%s651 + $0x20] sm:$0xff]
    %v657 = vld [vmem:[%s651 + $0x28] sm:$0xff]
    %v658 = vld [vmem:[%s651 + $0x30] sm:$0xff]
    %v659 = vld [vmem:[%s651 + $0x38] sm:$0xff]
    %v660 = vld [vmem:[%s651 + $0x40] sm:$0xff]
    %v662 = vsel %vm37, %v452, 0
    %v665 = vsel %vm37, %v457, 0
    %667 = vmatprep.subr.mxu0 0.0
    %668 = vmatpush1.msra.mxu0 %v652
    %669 = vmatprep.subr.mxu0 0.0
    %670 = vmatpush1.msra.mxu0 %v653
    %671 = vmatprep.subr.mxu0 0.0
    %672 = vmatpush1.msra.mxu0 %v654
    %673 = vmatprep.subr.mxu0 0.0
    %674 = vmatpush1.msra.mxu0 %v655
    %675 = vmatprep.subr.mxu0 0.0
    %676 = vmatpush1.msra.mxu0 %v656
    %677 = vmatprep.subr.mxu0 0.0
    %678 = vmatpush1.msra.mxu0 %v657
    %679 = vmatprep.subr.mxu0 0.0
    %680 = vmatpush1.msra.mxu0 %v658
    %681 = vmatprep.subr.mxu0 0.0
    %682 = vmatpush1.msra.mxu0 %v659
    %683 = vmatprep.subr.mxu0 0.0
    %684 = vmatpush1.msra.mxu0 %v660
    %685 = vmatprep.subr.mxu0 0.0
    %686 = vmatpush1.msra.mxu0 0.0
    %687 = vmatprep.subr.mxu0 0.0
    %688 = vmatpush1.msra.mxu0 0.0
    %689 = vmatprep.subr.mxu0 0.0
    %690 = vmatpush1.msra.mxu0 0.0
    %691 = vmatprep.subr.mxu0 0.0
    %692 = vmatpush1.msra.mxu0 0.0
    %693 = vmatprep.subr.mxu0 0.0
    %694 = vmatpush1.msra.mxu0 0.0
    %695 = vmatprep.subr.mxu0 0.0
    %696 = vmatpush1.msra.mxu0 0.0
    %697 = vmatprep.subr.mxu0 0.0
    %698 = vmatpush1.msra.mxu0 0.0
    %699 = vmatprep.subr.mxu0 0.0
    %700 = vmatpush1.msra.mxu0 0.0
    %701 = vmatprep.subr.mxu0 0.0
    %702 = vmatpush1.msra.mxu0 0.0
    %703 = vmatprep.subr.mxu0 0.0
    %704 = vmatpush1.msra.mxu0 0.0
    %705 = vmatprep.subr.mxu0 0.0
    %706 = vmatpush1.msra.mxu0 0.0
    %707 = vmatprep.subr.mxu0 0.0
    %708 = vmatpush1.msra.mxu0 0.0
    %709 = vmatprep.subr.mxu0 0.0
    %710 = vmatpush1.msra.mxu0 0.0
    %711 = vmatprep.subr.mxu0 0.0
    %712 = vmatpush1.msra.mxu0 0.0
    %713 = vmatprep.subr.mxu0 0.0
    %714 = vmatpush1.msra.mxu0 0.0
    %715 = vmatprep.subr.mxu0 0.0
    %716 = vmatpush1.msra.mxu0 0.0
    %717 = vmatprep.subr.mxu0 0.0
    %718 = vmatpush1.msra.mxu0 0.0
    %719 = vmatprep.subr.mxu0 0.0
    %720 = vmatpush1.msra.mxu0 0.0
    %721 = vmatprep.subr.mxu0 0.0
    %722 = vmatpush1.msra.mxu0 0.0
    %723 = vmatprep.subr.mxu0 0.0
    %724 = vmatpush1.msra.mxu0 0.0
    %725 = vmatprep.subr.mxu0 0.0
    %726 = vmatpush1.msra.mxu0 0.0
    %727 = vmatprep.subr.mxu0 0.0
    %728 = vmatpush1.msra.mxu0 0.0
    %729 = vmatprep.subr.mxu0 0.0
    %730 = vmatpush1.msra.mxu0 0.0
    %731 = vmatprep.mubr.f32.mxu0 0.0
    %732 = vmatmul.mubr.f32.gmra.mrb[0].mxu0 %v662
    %v733 = vpop.f32.mrb[0].mxu0
    %v734 = vadd.f32 0.0, %v733
    %v735 = vpop.f32.mrb[0].mxu0
    %736 = vmatprep.mubr.f32.mxu0 0.0
    %737 = vmatmul.mubr.f32.gmra.mrb[0].mxu0 %v665
    %v738 = vpop.f32.mrb[0].mxu0
    %v739 = vadd.f32 0.0, %v738
    %v740 = vpop.f32.mrb[0].mxu0
    %741 = vdwg.mxu0
    %v742 = vadd.f32 %v643, %v734
    %v743 = vadd.f32 %v648, %v739
    %s744 = scalar_lea.vmem %s1, 216
    %v745 = vld [vmem:[%s744] sm:$0xff]
    %v746 = vld [vmem:[%s744 + $0x8] sm:$0xff]
    %v747 = vld [vmem:[%s744 + $0x10] sm:$0xff]
    %v748 = vld [vmem:[%s744 + $0x18] sm:$0xff]
    %v749 = vld [vmem:[%s744 + $0x20] sm:$0xff]
    %v750 = vld [vmem:[%s744 + $0x28] sm:$0xff]
    %v751 = vld [vmem:[%s744 + $0x30] sm:$0xff]
    %v752 = vld [vmem:[%s744 + $0x38] sm:$0xff]
    %v753 = vld [vmem:[%s744 + $0x40] sm:$0xff]
    %v755 = vsel %vm37, %v462, 0
    %v758 = vsel %vm37, %v467, 0
    %760 = vmatprep.subr.mxu0 0.0
    %761 = vmatpush1.msra.mxu0 %v745
    %762 = vmatprep.subr.mxu0 0.0
    %763 = vmatpush1.msra.mxu0 %v746
    %764 = vmatprep.subr.mxu0 0.0
    %765 = vmatpush1.msra.mxu0 %v747
    %766 = vmatprep.subr.mxu0 0.0
    %767 = vmatpush1.msra.mxu0 %v748
    %768 = vmatprep.subr.mxu0 0.0
    %769 = vmatpush1.msra.mxu0 %v749
    %770 = vmatprep.subr.mxu0 0.0
    %771 = vmatpush1.msra.mxu0 %v750
    %772 = vmatprep.subr.mxu0 0.0
    %773 = vmatpush1.msra.mxu0 %v751
    %774 = vmatprep.subr.mxu0 0.0
    %775 = vmatpush1.msra.mxu0 %v752
    %776 = vmatprep.subr.mxu0 0.0
    %777 = vmatpush1.msra.mxu0 %v753
    %778 = vmatprep.subr.mxu0 0.0
    %779 = vmatpush1.msra.mxu0 0.0
    %780 = vmatprep.subr.mxu0 0.0
    %781 = vmatpush1.msra.mxu0 0.0
    %782 = vmatprep.subr.mxu0 0.0
    %783 = vmatpush1.msra.mxu0 0.0
    %784 = vmatprep.subr.mxu0 0.0
    %785 = vmatpush1.msra.mxu0 0.0
    %786 = vmatprep.subr.mxu0 0.0
    %787 = vmatpush1.msra.mxu0 0.0
    %788 = vmatprep.subr.mxu0 0.0
    %789 = vmatpush1.msra.mxu0 0.0
    %790 = vmatprep.subr.mxu0 0.0
    %791 = vmatpush1.msra.mxu0 0.0
    %792 = vmatprep.subr.mxu0 0.0
    %793 = vmatpush1.msra.mxu0 0.0
    %794 = vmatprep.subr.mxu0 0.0
    %795 = vmatpush1.msra.mxu0 0.0
    %796 = vmatprep.subr.mxu0 0.0
    %797 = vmatpush1.msra.mxu0 0.0
    %798 = vmatprep.subr.mxu0 0.0
    %799 = vmatpush1.msra.mxu0 0.0
    %800 = vmatprep.subr.mxu0 0.0
    %801 = vmatpush1.msra.mxu0 0.0
    %802 = vmatprep.subr.mxu0 0.0
    %803 = vmatpush1.msra.mxu0 0.0
    %804 = vmatprep.subr.mxu0 0.0
    %805 = vmatpush1.msra.mxu0 0.0
    %806 = vmatprep.subr.mxu0 0.0
    %807 = vmatpush1.msra.mxu0 0.0
    %808 = vmatprep.subr.mxu0 0.0
    %809 = vmatpush1.msra.mxu0 0.0
    %810 = vmatprep.subr.mxu0 0.0
    %811 = vmatpush1.msra.mxu0 0.0
    %812 = vmatprep.subr.mxu0 0.0
    %813 = vmatpush1.msra.mxu0 0.0
    %814 = vmatprep.subr.mxu0 0.0
    %815 = vmatpush1.msra.mxu0 0.0
    %816 = vmatprep.subr.mxu0 0.0
    %817 = vmatpush1.msra.mxu0 0.0
    %818 = vmatprep.subr.mxu0 0.0
    %819 = vmatpush1.msra.mxu0 0.0
    %820 = vmatprep.subr.mxu0 0.0
    %821 = vmatpush1.msra.mxu0 0.0
    %822 = vmatprep.subr.mxu0 0.0
    %823 = vmatpush1.msra.mxu0 0.0
    %824 = vmatprep.mubr.f32.mxu0 0.0
    %825 = vmatmul.mubr.f32.gmra.mrb[0].mxu0 %v755
    %v826 = vpop.f32.mrb[0].mxu0
    %v827 = vadd.f32 0.0, %v826
    %v828 = vpop.f32.mrb[0].mxu0
    %829 = vmatprep.mubr.f32.mxu0 0.0
    %830 = vmatmul.mubr.f32.gmra.mrb[0].mxu0 %v758
    %v831 = vpop.f32.mrb[0].mxu0
    %v832 = vadd.f32 0.0, %v831
    %v833 = vpop.f32.mrb[0].mxu0
    %834 = vdwg.mxu0
    %v835 = vadd.f32 %v742, %v827
    %v836 = vadd.f32 %v743, %v832
    %v837 = vld [vmem:[%s4 + $0x30] sm:$0xff]
    %v838 = vld [vmem:[%s4 + $0x38] sm:$0xff]
    %840 = vset.pattern.permute.xlu0 0
    %841 = vperm.xlu0 %840, %v837
    %v842 = vpop.permute.xlu0 %841
    %845 = vset.pattern.permute.xlu0 0
    %846 = vperm.xlu0 %845, %v838
    %v847 = vpop.permute.xlu0 %846
    %v849 = vadd.f32 %v835, %v842
    %v850 = vadd.f32 %v836, %v847
    %vm851 = vcmp.gt.f32.partialorder %v849, 0.0
    %vm852 = vcmp.gt.f32.partialorder %v850, 0.0
    %v853 = vmin.f32 %v849, 0.0
    %v854 = vmin.f32 %v850, 0.0
    %v855 = vmul.f32 %v853, 1.442695
    %v856 = vpow.pop %v855
    %v857 = vmul.f32 %v854, 1.442695
    %v858 = vpow.pop %v857
    %v859 = vsub.f32 %v856, 1.0
    %v860 = vsub.f32 %v858, 1.0
    %v861 = vsel %vm851, %v849, %v859
    %v862 = vsel %vm852, %v850, %v860
    %v863 = vld [vmem:[#allocation3] sm:$0xff]
    %v864 = vld [vmem:[#allocation3 + $0x8] sm:$0xf]
    %vm865 = vcmask 97280
    %v867 = vsel %vm865, %v861, 0
    %v870 = vsel %vm865, %v862, 0
    %vm872 = vcmask 1043456
    %v874 = vsel %vm872, %v864, 0
    %876 = vmatprep.subr.mxu0 0.0
    %877 = vmatpush1.msra.mxu0 %v863
    %878 = vmatprep.subr.mxu0 0.0
    %879 = vmatpush1.msra.mxu0 %v874
    %880 = vmatprep.subr.mxu0 0.0
    %881 = vmatpush1.msra.mxu0 0.0
    %882 = vmatprep.subr.mxu0 0.0
    %883 = vmatpush1.msra.mxu0 0.0
    %884 = vmatprep.subr.mxu0 0.0
    %885 = vmatpush1.msra.mxu0 0.0
    %886 = vmatprep.subr.mxu0 0.0
    %887 = vmatpush1.msra.mxu0 0.0
    %888 = vmatprep.subr.mxu0 0.0
    %889 = vmatpush1.msra.mxu0 0.0
    %890 = vmatprep.subr.mxu0 0.0
    %891 = vmatpush1.msra.mxu0 0.0
    %892 = vmatprep.subr.mxu0 0.0
    %893 = vmatpush1.msra.mxu0 0.0
    %894 = vmatprep.subr.mxu0 0.0
    %895 = vmatpush1.msra.mxu0 0.0
    %896 = vmatprep.subr.mxu0 0.0
    %897 = vmatpush1.msra.mxu0 0.0
    %898 = vmatprep.subr.mxu0 0.0
    %899 = vmatpush1.msra.mxu0 0.0
    %900 = vmatprep.subr.mxu0 0.0
    %901 = vmatpush1.msra.mxu0 0.0
    %902 = vmatprep.subr.mxu0 0.0
    %903 = vmatpush1.msra.mxu0 0.0
    %904 = vmatprep.subr.mxu0 0.0
    %905 = vmatpush1.msra.mxu0 0.0
    %906 = vmatprep.subr.mxu0 0.0
    %907 = vmatpush1.msra.mxu0 0.0
    %908 = vmatprep.subr.mxu0 0.0
    %909 = vmatpush1.msra.mxu0 0.0
    %910 = vmatprep.subr.mxu0 0.0
    %911 = vmatpush1.msra.mxu0 0.0
    %912 = vmatprep.subr.mxu0 0.0
    %913 = vmatpush1.msra.mxu0 0.0
    %914 = vmatprep.subr.mxu0 0.0
    %915 = vmatpush1.msra.mxu0 0.0
    %916 = vmatprep.subr.mxu0 0.0
    %917 = vmatpush1.msra.mxu0 0.0
    %918 = vmatprep.subr.mxu0 0.0
    %919 = vmatpush1.msra.mxu0 0.0
    %920 = vmatprep.subr.mxu0 0.0
    %921 = vmatpush1.msra.mxu0 0.0
    %922 = vmatprep.subr.mxu0 0.0
    %923 = vmatpush1.msra.mxu0 0.0
    %924 = vmatprep.subr.mxu0 0.0
    %925 = vmatpush1.msra.mxu0 0.0
    %926 = vmatprep.subr.mxu0 0.0
    %927 = vmatpush1.msra.mxu0 0.0
    %928 = vmatprep.subr.mxu0 0.0
    %929 = vmatpush1.msra.mxu0 0.0
    %930 = vmatprep.subr.mxu0 0.0
    %931 = vmatpush1.msra.mxu0 0.0
    %932 = vmatprep.subr.mxu0 0.0
    %933 = vmatpush1.msra.mxu0 0.0
    %934 = vmatprep.subr.mxu0 0.0
    %935 = vmatpush1.msra.mxu0 0.0
    %936 = vmatprep.subr.mxu0 0.0
    %937 = vmatpush1.msra.mxu0 0.0
    %938 = vmatprep.subr.mxu0 0.0
    %939 = vmatpush1.msra.mxu0 0.0
    %940 = vmatprep.mubr.f32.mxu0 0.0
    %941 = vmatmul.mubr.f32.gmra.mrb[0].mxu0 %v867
    %v942 = vpop.f32.mrb[0].mxu0
    %v943 = vadd.f32 0.0, %v942
    %v944 = vpop.f32.mrb[0].mxu0
    %945 = vmatprep.mubr.f32.mxu0 0.0
    %946 = vmatmul.mubr.f32.gmra.mrb[0].mxu0 %v870
    %v947 = vpop.f32.mrb[0].mxu0
    %v948 = vadd.f32 0.0, %v947
    %v949 = vpop.f32.mrb[0].mxu0
    %950 = vdwg.mxu0
    %v951 = vld [vmem:[%s3 + $0xe0] sm:$0xff]
    %v952 = vld [vmem:[%s3 + $0xe8] sm:$0xff]
    %v953 = vld [vmem:[%s3 + $0xf0] sm:$0xff]
    %v954 = vld [vmem:[%s3 + $0xf8] sm:$0xff]
    %955 = vxpose.xlu0.b32.start [1/16] %v943, 128
    %956 = vxpose.xlu0.b32.cont [2/16] %v948, 128
    %957 = vxpose.xlu0.b32.cont [3/16] 0.0, 128
    %958 = vxpose.xlu0.b32.cont [4/16] 0.0, 128
    %959 = vxpose.xlu0.b32.cont [5/16] 0.0, 128
    %960 = vxpose.xlu0.b32.cont [6/16] 0.0, 128
    %961 = vxpose.xlu0.b32.cont [7/16] 0.0, 128
    %962 = vxpose.xlu0.b32.cont [8/16] 0.0, 128
    %963 = vxpose.xlu0.b32.cont [9/16] 0.0, 128
    %964 = vxpose.xlu0.b32.cont [10/16] 0.0, 128
    %965 = vxpose.xlu0.b32.cont [11/16] 0.0, 128
    %966 = vxpose.xlu0.b32.cont [12/16] 0.0, 128
    %967 = vxpose.xlu0.b32.cont [13/16] 0.0, 128
    %968 = vxpose.xlu0.b32.cont [14/16] 0.0, 128
    %969 = vxpose.xlu0.b32.cont [15/16] 0.0, 128
    %970 = vxpose.xlu0.b32.end [16/16] 0.0, 128
    %v971 = vpop.trf.xlu0
    %v972 = vpop.trf.xlu0
    %v973 = vpop.trf.xlu0
    %v974 = vpop.trf.xlu0
    %v975 = vpop.trf.xlu0
    %v976 = vpop.trf.xlu0
    %v977 = vpop.trf.xlu0
    %v978 = vpop.trf.xlu0
    %v979 = vpop.trf.xlu0
    %v980 = vpop.trf.xlu0
    %v981 = vpop.trf.xlu0
    %v982 = vpop.trf.xlu0
    %v983 = vpop.trf.xlu0
    %v984 = vpop.trf.xlu0
    %v985 = vpop.trf.xlu0
    %v986 = vpop.trf.xlu0
    %vm987 = vcmask 130048
    %v989 = vsel %vm987, %v971, 0
    %v992 = vsel %vm987, %v972, 0
    %994 = vmatprep.subr.mxu0 %v952
    %995 = vmatpush1.msra.mxu0 %v951
    %996 = vmatprep.subr.mxu0 %v954
    %997 = vmatpush1.msra.mxu0 %v953
    %998 = vmatprep.subr.mxu0 0.0
    %999 = vmatpush1.msra.mxu0 0.0
    %1000 = vmatprep.subr.mxu0 0.0
    %1001 = vmatpush1.msra.mxu0 0.0
    %1002 = vmatprep.subr.mxu0 0.0
    %1003 = vmatpush1.msra.mxu0 0.0
    %1004 = vmatprep.subr.mxu0 0.0
    %1005 = vmatpush1.msra.mxu0 0.0
    %1006 = vmatprep.subr.mxu0 0.0
    %1007 = vmatpush1.msra.mxu0 0.0
    %1008 = vmatprep.subr.mxu0 0.0
    %1009 = vmatpush1.msra.mxu0 0.0
    %1010 = vmatprep.subr.mxu0 0.0
    %1011 = vmatpush1.msra.mxu0 0.0
    %1012 = vmatprep.subr.mxu0 0.0
    %1013 = vmatpush1.msra.mxu0 0.0
    %1014 = vmatprep.subr.mxu0 0.0
    %1015 = vmatpush1.msra.mxu0 0.0
    %1016 = vmatprep.subr.mxu0 0.0
    %1017 = vmatpush1.msra.mxu0 0.0
    %1018 = vmatprep.subr.mxu0 0.0
    %1019 = vmatpush1.msra.mxu0 0.0
    %1020 = vmatprep.subr.mxu0 0.0
    %1021 = vmatpush1.msra.mxu0 0.0
    %1022 = vmatprep.subr.mxu0 0.0
    %1023 = vmatpush1.msra.mxu0 0.0
    %1024 = vmatprep.subr.mxu0 0.0
    %1025 = vmatpush1.msra.mxu0 0.0
    %1026 = vmatprep.subr.mxu0 0.0
    %1027 = vmatpush1.msra.mxu0 0.0
    %1028 = vmatprep.subr.mxu0 0.0
    %1029 = vmatpush1.msra.mxu0 0.0
    %1030 = vmatprep.subr.mxu0 0.0
    %1031 = vmatpush1.msra.mxu0 0.0
    %1032 = vmatprep.subr.mxu0 0.0
    %1033 = vmatpush1.msra.mxu0 0.0
    %1034 = vmatprep.subr.mxu0 0.0
    %1035 = vmatpush1.msra.mxu0 0.0
    %1036 = vmatprep.subr.mxu0 0.0
    %1037 = vmatpush1.msra.mxu0 0.0
    %1038 = vmatprep.subr.mxu0 0.0
    %1039 = vmatpush1.msra.mxu0 0.0
    %1040 = vmatprep.subr.mxu0 0.0
    %1041 = vmatpush1.msra.mxu0 0.0
    %1042 = vmatprep.subr.mxu0 0.0
    %1043 = vmatpush1.msra.mxu0 0.0
    %1044 = vmatprep.subr.mxu0 0.0
    %1045 = vmatpush1.msra.mxu0 0.0
    %1046 = vmatprep.subr.mxu0 0.0
    %1047 = vmatpush1.msra.mxu0 0.0
    %1048 = vmatprep.subr.mxu0 0.0
    %1049 = vmatpush1.msra.mxu0 0.0
    %1050 = vmatprep.subr.mxu0 0.0
    %1051 = vmatpush1.msra.mxu0 0.0
    %1052 = vmatprep.subr.mxu0 0.0
    %1053 = vmatpush1.msra.mxu0 0.0
    %1054 = vmatprep.subr.mxu0 0.0
    %1055 = vmatpush1.msra.mxu0 0.0
    %1056 = vmatprep.subr.mxu0 0.0
    %1057 = vmatpush1.msra.mxu0 0.0
    %1058 = vmatprep.mubr.f32.mxu0 0.0
    %1059 = vmatmul.mubr.f32.gmra.mrb[0].mxu0 %v989
    %v1060 = vpop.f32.mrb[0].mxu0
    %v1061 = vadd.f32 0.0, %v1060
    %v1062 = vpop.f32.mrb[0].mxu0
    %1063 = vmatprep.mubr.f32.mxu0 0.0
    %1064 = vmatmul.mubr.f32.gmra.mrb[0].mxu0 %v992
    %v1065 = vpop.f32.mrb[0].mxu0
    %v1066 = vpop.f32.mrb[0].mxu0
    %v1067 = vadd.f32 0.0, %v1066
    %1068 = vdwg.mxu0
    %v1069 = vld [vmem:[%s4 + $0x40] sm:$0x1]
    %v1070 = vlaneseq
    %v1071 = vshrl.u32 %v1070, 7
    %v1072 = vsub.s32 0, %v1071
    %v1073 = vrot.slane %v1069, %v1072
    %v1074 = vadd.f32 %v1073, %v1061
    %v1075 = vadd.f32 %v1074, %v1067
    %1076 = vmax.xlane.f32.xlu0 %v1075
    %v1077 = vpop.xlane.xlu0 %1076
    %v1078 = vsub.f32 %v1075, %v1077
    %v1079 = vmul.f32 %v1078, 1.442695
    %v1080 = vpow.pop %v1079
    %1081 = vadd.xlane.f32.xlu0 %v1080
    %v1082 = vpop.xlane.xlu0 %1081
    %v1083 = vrcp.pop %v1082
    %v1084 = vmul.f32 %v1080, %v1083
    %1085 = vst [vmem:[#allocation6] sm:$0xff] %v1084
    // Predicated region
    $region26: #{tpu_custom_call.1} parent=1 // pred_check
      _
    $region27: #{tpu_custom_call.1} parent=1 // pred_check_branch
      %1087 = sbr.rel (0) target = $region29
    $region28: #{tpu_custom_call.1} parent=1 // pred_region
      %s1089 = ssub.s32 128, 128
      %1090 = vsyncadd [#allocation5], %s1089
      %s1092 = sshll.u32 [#allocation6], 4
      %s1093 = int_to_ptr.vmem [resolvable:$true] %s1092
      %1095 = dma.vmem_to_hbm [thread:$0]  %s1093, 128, %s5, [#allocation5]
    $region29: #{tpu_custom_call.1} parent=1 // pred_fallthru
      _
    // Predicated region
    $region30: #{tpu_custom_call.1} parent=1 // pred_check
      _
    $region31: #{tpu_custom_call.1} parent=1 // pred_check_branch
      %1097 = sbr.rel (0) target = $region33
    $region32: #{tpu_custom_call.1} parent=1 // pred_region
      %1098 = dma.done [#allocation5], 128
    $region33: #{tpu_custom_call.1} parent=1 // pred_fallthru
      _
    %1099 = vsyncpa [#allocation4], 1
    %1100 = vsyncpa [#allocation5], 1

</llo_original>
